<compile_context>
chip_gen: v7x
topology: tpu7x:2x2x1
jax: 0.10.0
libtpu: 0.0.40
codegen_flags: <defaults>
</compile_context>

<pallas_src>
import functools
import math

import jax
import jax.numpy as jnp
from jax.experimental import pallas as pl
from jax.experimental.pallas import tpu as pltpu

VMEM_SPEC = pl.BlockSpec(memory_space=pltpu.MemorySpace.VMEM)


def _round_up(x, m):
    return ((x + m - 1) // m) * m


# --------------------------------------------------------------------------
# Transformer encoder layer (post-norm, ReLU FFN) — gridded over batch tiles
# --------------------------------------------------------------------------
def transformer_layer_kernel(x_ref, wqkv_ref, bqkv_ref, wo_ref, bo_ref,
                             ln1g_ref, ln1b_ref, w1_ref, b1_ref,
                             w2_ref, b2_ref, ln2g_ref, ln2b_ref,
                             o_ref, *, nhead):
    bt, s, e = x_ref.shape
    hd = e // nhead
    scale = 1.0 / math.sqrt(hd)

    x2 = x_ref[...].reshape(bt * s, e)                       # [bt*S, E]

    # single QKV projection for the whole block
    qkv = (jnp.dot(x2, wqkv_ref[...], preferred_element_type=jnp.float32)
           + bqkv_ref[...])                                   # [bt*S, 3E]
    qkv = qkv.reshape(bt, s, 3 * e)

    # per-head batched attention (batch dim handled by einsum, not a loop)
    ctx_heads = []
    for h in range(nhead):
        c0 = h * hd
        qh = qkv[:, :, c0:c0 + hd]                            # [bt, S, hd]
        kh = qkv[:, :, e + c0:e + c0 + hd]
        vh = qkv[:, :, 2 * e + c0:2 * e + c0 + hd]
        sc = jnp.einsum('bqd,bkd->bqk', qh, kh,
                        preferred_element_type=jnp.float32) * scale
        sc = sc - jnp.max(sc, axis=-1, keepdims=True)
        p = jnp.exp(sc)
        p = p * pl.reciprocal(jnp.sum(p, axis=-1, keepdims=True), approx=True)
        ctx_heads.append(jnp.einsum('bqk,bkd->bqd', p, vh,
                                    preferred_element_type=jnp.float32))
    ctx = jnp.concatenate(ctx_heads, axis=-1).reshape(bt * s, e)

    attn = (jnp.dot(ctx, wo_ref[...], preferred_element_type=jnp.float32)
            + bo_ref[...])

    def layer_norm(z, gamma, beta):
        mu = jnp.mean(z, axis=-1, keepdims=True)
        var = jnp.mean(z * z, axis=-1, keepdims=True) - mu * mu
        return (z - mu) * jax.lax.rsqrt(var + 1e-5) * gamma + beta

    y = layer_norm(x2 + attn, ln1g_ref[...], ln1b_ref[...])
    ff = jnp.maximum(
        jnp.dot(y, w1_ref[...], preferred_element_type=jnp.float32)
        + b1_ref[...], 0.0)
    ff2 = (jnp.dot(ff, w2_ref[...], preferred_element_type=jnp.float32)
           + b2_ref[...])
    o_ref[...] = layer_norm(y + ff2, ln2g_ref[...], ln2b_ref[...]).reshape(
        bt, s, e)


def transformer_layer(x_bse, lp, *, nhead, batch_tile=1):
    b, s, e = x_bse.shape
    assert b % batch_tile == 0
    grid = (b // batch_tile,)

    weights = [lp["wqkv"], lp["bqkv"], lp["wo"], lp["bo"],
               lp["ln1g"], lp["ln1b"], lp["w1"], lp["b1"],
               lp["w2"], lp["b2"], lp["ln2g"], lp["ln2b"]]

    x_spec = pl.BlockSpec((batch_tile, s, e), lambda i: (i, 0, 0))
    w_specs = [pl.BlockSpec(w.shape, lambda i: (0, 0)) for w in weights]

    return pl.pallas_call(
        functools.partial(transformer_layer_kernel, nhead=nhead),
        out_shape=jax.ShapeDtypeStruct((b, s, e), jnp.float32),
        grid=grid,
        in_specs=[x_spec] + w_specs,
        out_specs=pl.BlockSpec((batch_tile, s, e), lambda i: (i, 0, 0)),
        compiler_params=pltpu.CompilerParams(
            dimension_semantics=("parallel",)),
    )(x_bse, *weights)


# --------------------------------------------------------------------------
# LSTM (packed-sequence semantics via length masking, hoisted input matmul)
# --------------------------------------------------------------------------
def _lstm_scan(x_ref, len_ref, wih_ref, whh_ref, b_ref, gxa_ref, out_ref, *,
               seq_len, batch):
    hp = whh_ref.shape[0]

    # Hoisted input projection: one big MXU matmul over all (t, b) rows.
    gxa_ref[...] = (jnp.dot(x_ref[...], wih_ref[...],
                            preferred_element_type=jnp.float32) + b_ref[...])

    lengths = len_ref[...]                                    # [B, 1] int32

    def step(t, carry):
        h, c = carry
        row0 = pl.multiple_of(t * batch, batch)
        gates = (gxa_ref[pl.ds(row0, batch), :]
                 + jnp.dot(h, whh_ref[...],
                           preferred_element_type=jnp.float32))  # [B, 4*Hp]
        # gate slices are 128-lane aligned (Hp is a multiple of 128)
        i_g = jax.nn.sigmoid(gates[:, 0 * hp:1 * hp])
        f_g = jax.nn.sigmoid(gates[:, 1 * hp:2 * hp])
        g_g = jnp.tanh(gates[:, 2 * hp:3 * hp])
        o_g = jax.nn.sigmoid(gates[:, 3 * hp:4 * hp])
        c_new = f_g * c + i_g * g_g
        h_new = o_g * jnp.tanh(c_new)
        mask = t < lengths                                    # [B, 1] bool
        if out_ref is not None:
            out_ref[pl.ds(row0, batch), :] = jnp.where(
                mask, h_new, jnp.zeros_like(h_new))
        return jnp.where(mask, h_new, h), jnp.where(mask, c_new, c)

    h0 = jnp.zeros((batch, hp), jnp.float32)
    c0 = jnp.zeros((batch, hp), jnp.float32)
    h_fin, _ = jax.lax.fori_loop(0, seq_len, step, (h0, c0))
    return h_fin


def lstm_mid_kernel(x_ref, len_ref, wih_ref, whh_ref, b_ref,
                    out_ref, gxa_ref, *, seq_len, batch):
    _lstm_scan(x_ref, len_ref, wih_ref, whh_ref, b_ref, gxa_ref, out_ref,
               seq_len=seq_len, batch=batch)


def lstm_last_kernel(x_ref, len_ref, wih_ref, whh_ref, b_ref,
                     wout_ref, bout_ref, logits_ref, gxa_ref, *,
                     seq_len, batch):
    h_fin = _lstm_scan(x_ref, len_ref, wih_ref, whh_ref, b_ref, gxa_ref, None,
                       seq_len=seq_len, batch=batch)
    # fused dataset head:  dropout(final_hidden_state[-1]) @ W_out + b_out
    logits_ref[...] = (jnp.dot(h_fin, wout_ref[...],
                               preferred_element_type=jnp.float32)
                       + bout_ref[...])


def lstm_mid(x2, lens, lp, *, seq_len, batch):
    hp = lp["whh"].shape[0]
    return pl.pallas_call(
        functools.partial(lstm_mid_kernel, seq_len=seq_len, batch=batch),
        out_shape=jax.ShapeDtypeStruct((seq_len * batch, hp), jnp.float32),
        in_specs=[VMEM_SPEC] * 5,
        out_specs=VMEM_SPEC,
        scratch_shapes=[pltpu.VMEM((seq_len * batch, 4 * hp), jnp.float32)],
    )(x2, lens, lp["wih"], lp["whh"], lp["b"])


def lstm_last(x2, lens, lp, wout, bout, *, seq_len, batch):
    hp = lp["whh"].shape[0]
    labels = wout.shape[1]
    return pl.pallas_call(
        functools.partial(lstm_last_kernel, seq_len=seq_len, batch=batch),
        out_shape=jax.ShapeDtypeStruct((batch, labels), jnp.float32),
        in_specs=[VMEM_SPEC] * 7,
        out_specs=VMEM_SPEC,
        scratch_shapes=[pltpu.VMEM((seq_len * batch, 4 * hp), jnp.float32)],
    )(x2, lens, lp["wih"], lp["whh"], lp["b"], wout, bout)


# --------------------------------------------------------------------------
# Parameter construction (deterministic, synthetic; LSTM/head weights are
# zero-padded to lane-aligned sizes — semantics identical to unpadded model)
# --------------------------------------------------------------------------
def init_params(key, *, vocab_size, embedding_size, nhead,
                transformer_hidden_size, transformer_layers,
                hidden_size, lstm_layers, labels, max_seq_length):
    e = embedding_size
    f = transformer_hidden_size
    h = hidden_size
    hp = _round_up(h, 128)
    keys = iter(jax.random.split(key, 256))

    def rnd(shape, scale=0.1):
        return jax.random.normal(next(keys), shape, jnp.float32) * scale

    params = {"embedding": rnd((vocab_size, e), 1.0)}

    # sinusoidal positional encoding (same formula as PositionalEncoding)
    position = jnp.arange(max_seq_length, dtype=jnp.float32)[:, None]
    div_term = jnp.exp(jnp.arange(0, e, 2, dtype=jnp.float32)
                       * (-math.log(10000.0) / e))
    pe = jnp.zeros((max_seq_length, e), jnp.float32)
    pe = pe.at[:, 0::2].set(jnp.sin(position * div_term))
    pe = pe.at[:, 1::2].set(jnp.cos(position * div_term))
    params["pe"] = pe

    params["transformer"] = [dict(
        wqkv=rnd((e, 3 * e)), bqkv=rnd((1, 3 * e)),
        wo=rnd((e, e)), bo=rnd((1, e)),
        ln1g=jnp.ones((1, e), jnp.float32),
        ln1b=jnp.zeros((1, e), jnp.float32),
        w1=rnd((e, f)), b1=rnd((1, f)),
        w2=rnd((f, e)), b2=rnd((1, e)),
        ln2g=jnp.ones((1, e), jnp.float32),
        ln2b=jnp.zeros((1, e), jnp.float32),
    ) for _ in range(transformer_layers)]

    # LSTM weights in gate-padded, right-multiply layout:
    #   gate g occupies columns [g*hp, g*hp + h) of a 4*hp-wide matrix;
    #   padded lanes / rows are exactly zero -> math equals unpadded model.
    llayers = []
    in_true, in_pad = e, e
    for _ in range(lstm_layers):
        wih = jnp.zeros((in_pad, 4 * hp), jnp.float32)
        whh = jnp.zeros((hp, 4 * hp), jnp.float32)
        bias = jnp.zeros((1, 4 * hp), jnp.float32)
        for g in range(4):
            wih = wih.at[:in_true, g * hp:g * hp + h].set(rnd((in_true, h)))
            whh = whh.at[:h, g * hp:g * hp + h].set(rnd((h, h)))
            bias = bias.at[:, g * hp:g * hp + h].set(rnd((1, h)))
        llayers.append(dict(wih=wih, whh=whh, b=bias))
        in_true, in_pad = h, hp
    params["lstm"] = llayers

    params["wout"] = jnp.zeros((hp, labels), jnp.float32).at[:h].set(
        rnd((h, labels)))
    params["bout"] = rnd((1, labels))
    return params


# --------------------------------------------------------------------------
# Full forward pass (glue in plain JAX, hot paths in Pallas)
# --------------------------------------------------------------------------
def forward(tokens, lengths, params, *, nhead):
    # tokens: [S, B] int32, lengths: [B] int32 (sorted descending).
    s, b = tokens.shape
    e = params["embedding"].shape[1]

    # embedding * sqrt(E) + positional encoding (dropout == identity),
    # built directly in batch-major [B, S, E] (only int token ids transposed).
    # TODO(synk): embedding gather stays in XLA (jnp.take); a scalar-prefetch
    # DMA-gather kernel could fold it into the first transformer layer.
    emb = jnp.take(params["embedding"], tokens.T, axis=0) * math.sqrt(e)
    x = emb + params["pe"][:s][None, :, :]                   # [B, S, E]

    # transformer encoder — grid over batch, one sequence per block
    for lp in params["transformer"]:
        x = transformer_layer(x, lp, nhead=nhead, batch_tile=1)

    # time-major 2-D rows for the LSTM; pad batch to a sublane multiple (>=8)
    b_pad = _round_up(b, 8)
    x_sb = jnp.transpose(x, (1, 0, 2))                       # [S, B, E]
    x_sb = jnp.pad(x_sb, ((0, 0), (0, b_pad - b), (0, 0)))
    seq = x_sb.reshape(s * b_pad, e)                         # rows = (t, b)
    lens = jnp.pad(lengths.astype(jnp.int32),
                   (0, b_pad - b)).reshape(b_pad, 1)

    logits = None
    n_lstm = len(params["lstm"])
    for li, lp in enumerate(params["lstm"]):
        if li == n_lstm - 1:
            # last layer: recurrence + fused classification head
            logits = lstm_last(seq, lens, lp, params["wout"], params["bout"],
                               seq_len=s, batch=b_pad)
        else:
            seq = lstm_mid(seq, lens, lp, seq_len=s, batch=b_pad)

    return logits[:b]                                        # drop batch pad


# --------------------------------------------------------------------------
if __name__ == "__main__":
    # small, module-consistent shapes
    S, B = 8, 2                     # max_seq_length used, batch
    EMB, NHEAD = 32, 4
    T_HIDDEN, T_LAYERS = 64, 2
    HIDDEN, LSTM_LAYERS = 32, 1
    VOCAB, LABELS = 50, 3
    MAX_LEN = 64

    key = jax.random.PRNGKey(0)
    k_par, k_tok = jax.random.split(key)

    params = init_params(
        k_par, vocab_size=VOCAB, embedding_size=EMB, nhead=NHEAD,
        transformer_hidden_size=T_HIDDEN, transformer_layers=T_LAYERS,
        hidden_size=HIDDEN, lstm_layers=LSTM_LAYERS, labels=LABELS,
        max_seq_length=MAX_LEN)

    tokens = jax.random.randint(k_tok, (S, B), 0, VOCAB, dtype=jnp.int32)
    lengths = jnp.array([8, 5], dtype=jnp.int32)   # sorted descending

    fwd = jax.jit(functools.partial(forward, nhead=NHEAD))
    logits = fwd(tokens, lengths, params)
    jax.block_until_ready(logits)
    assert logits.shape == (B, LABELS)
    print("KERNEL_OK")
</pallas_src>

<mosaic_0001>
module attributes {stable_mosaic.version = 11 : i64} {
  func.func @lstm_last_kernel(%arg0: memref<64x32xf32, #tpu.memory_space<vmem>>, %arg1: memref<8x1xi32, #tpu.memory_space<vmem>>, %arg2: memref<32x512xf32, #tpu.memory_space<vmem>>, %arg3: memref<128x512xf32, #tpu.memory_space<vmem>>, %arg4: memref<1x512xf32, #tpu.memory_space<vmem>>, %arg5: memref<128x3xf32, #tpu.memory_space<vmem>>, %arg6: memref<1x3xf32, #tpu.memory_space<vmem>>, %arg7: memref<8x3xf32, #tpu.memory_space<vmem>>, %arg8: memref<64x512xf32, #tpu.memory_space<vmem>>) attributes {dimension_semantics = [], scalar_prefetch = 0 : i64, scratch_operands = 1 : i64, tpu.core_type = #tpu.core_type<tc>} {
    %c0 = arith.constant 0 : index
    %c0_0 = arith.constant 0 : index
    %0 = vector.load %arg0[%c0, %c0_0] : memref<64x32xf32, #tpu.memory_space<vmem>>, vector<64x32xf32>
    %c0_1 = arith.constant 0 : index
    %c0_2 = arith.constant 0 : index
    %1 = vector.load %arg2[%c0_1, %c0_2] : memref<32x512xf32, #tpu.memory_space<vmem>>, vector<32x512xf32>
    %cst = arith.constant dense<0.000000e+00> : vector<64x512xf32>
    %2 = tpu.matmul %0, %1, %cst {dimension_numbers = #tpu.dot_dimension_numbers<[1], [0], [0], [1], [0, 0, 1, 1], [], []>} : vector<64x32xf32>, vector<32x512xf32>, vector<64x512xf32> -> vector<64x512xf32>
    %c0_3 = arith.constant 0 : index
    %c0_4 = arith.constant 0 : index
    %3 = vector.load %arg4[%c0_3, %c0_4] : memref<1x512xf32, #tpu.memory_space<vmem>>, vector<1x512xf32>
    %4 = vector.broadcast %3 : vector<1x512xf32> to vector<64x512xf32>
    %5 = arith.addf %2, %4 : vector<64x512xf32>
    %c0_5 = arith.constant 0 : index
    %c0_6 = arith.constant 0 : index
    %6 = vector.load %arg8[%c0_5, %c0_6] : memref<64x512xf32, #tpu.memory_space<vmem>>, vector<64x512xf32>
    tpu.vector_store %arg8[%c0_5, %c0_6], %5 {strides = array<i32>} : memref<64x512xf32, #tpu.memory_space<vmem>>, vector<64x512xf32>,
    %c0_7 = arith.constant 0 : index
    %c0_8 = arith.constant 0 : index
    %7 = vector.load %arg1[%c0_7, %c0_8] : memref<8x1xi32, #tpu.memory_space<vmem>>, vector<8x1xi32>
    %cst_9 = arith.constant 0.000000e+00 : f32
    %8 = vector.broadcast %cst_9 : f32 to vector<8x128xf32>
    %cst_10 = arith.constant 0.000000e+00 : f32
    %9 = vector.broadcast %cst_10 : f32 to vector<8x128xf32>
    %c0_i32 = arith.constant 0 : i32
    %c8_i32 = arith.constant 8 : i32
    %10 = arith.addi %c0_i32, %c8_i32 : i32
    %c1_i32 = arith.constant 1 : i32
    %11:2 = scf.for %arg9 = %c0_i32 to %10 step %c1_i32 iter_args(%arg10 = %8, %arg11 = %9) -> (vector<8x128xf32>, vector<8x128xf32>)  : i32 {
      %c8_i32_19 = arith.constant 8 : i32
      %18 = arith.muli %arg9, %c8_i32_19 : i32
      %19 = tpu.assume_multiple %18, 8 : i32
      %20 = arith.index_cast %19 : i32 to index
      %c0_20 = arith.constant 0 : index
      %21 = vector.load %arg8[%20, %c0_20] : memref<64x512xf32, #tpu.memory_space<vmem>>, vector<8x512xf32>
      %c0_21 = arith.constant 0 : index
      %c0_22 = arith.constant 0 : index
      %22 = vector.load %arg3[%c0_21, %c0_22] : memref<128x512xf32, #tpu.memory_space<vmem>>, vector<128x512xf32>
      %cst_23 = arith.constant dense<0.000000e+00> : vector<8x512xf32>
      %23 = tpu.matmul %arg10, %22, %cst_23 {dimension_numbers = #tpu.dot_dimension_numbers<[1], [0], [0], [1], [0, 0, 1, 1], [], []>} : vector<8x128xf32>, vector<128x512xf32>, vector<8x512xf32> -> vector<8x512xf32>
      %24 = arith.addf %21, %23 : vector<8x512xf32>
      %25 = vector.extract_strided_slice %24 {offsets = [0, 0], sizes = [8, 128], strides = [1, 1]} : vector<8x512xf32> to vector<8x128xf32>
      %26 = arith.negf %25 : vector<8x128xf32>
      %27 = math.exp %26 : vector<8x128xf32>
      %cst_24 = arith.constant 1.000000e+00 : f32
      %28 = vector.broadcast %cst_24 : f32 to vector<8x128xf32>
      %29 = arith.addf %28, %27 : vector<8x128xf32>
      %30 = arith.divf %28, %29 : vector<8x128xf32>
      %31 = vector.extract_strided_slice %24 {offsets = [0, 128], sizes = [8, 128], strides = [1, 1]} : vector<8x512xf32> to vector<8x128xf32>
      %32 = arith.negf %31 : vector<8x128xf32>
      %33 = math.exp %32 : vector<8x128xf32>
      %cst_25 = arith.constant 1.000000e+00 : f32
      %34 = vector.broadcast %cst_25 : f32 to vector<8x128xf32>
      %35 = arith.addf %34, %33 : vector<8x128xf32>
      %36 = arith.divf %34, %35 : vector<8x128xf32>
      %37 = vector.extract_strided_slice %24 {offsets = [0, 256], sizes = [8, 128], strides = [1, 1]} : vector<8x512xf32> to vector<8x128xf32>
      %38 = math.tanh %37 : vector<8x128xf32>
      %39 = vector.extract_strided_slice %24 {offsets = [0, 384], sizes = [8, 128], strides = [1, 1]} : vector<8x512xf32> to vector<8x128xf32>
      %40 = arith.negf %39 : vector<8x128xf32>
      %41 = math.exp %40 : vector<8x128xf32>
      %cst_26 = arith.constant 1.000000e+00 : f32
      %42 = vector.broadcast %cst_26 : f32 to vector<8x128xf32>
      %43 = arith.addf %42, %41 : vector<8x128xf32>
      %44 = arith.divf %42, %43 : vector<8x128xf32>
      %45 = arith.mulf %36, %arg11 : vector<8x128xf32>
      %46 = arith.mulf %30, %38 : vector<8x128xf32>
      %47 = arith.addf %45, %46 : vector<8x128xf32>
      %48 = math.tanh %47 : vector<8x128xf32>
      %49 = arith.mulf %44, %48 : vector<8x128xf32>
      %50 = vector.broadcast %arg9 : i32 to vector<8x1xi32>
      %51 = arith.cmpi slt, %50, %7 : vector<8x1xi32>
      %52 = vector.shape_cast %51 : vector<8x1xi1> to vector<8x1xi1>
      %53 = vector.broadcast %52 : vector<8x1xi1> to vector<8x128xi1>
      %54 = arith.select %53, %49, %arg10 : vector<8x128xi1>, vector<8x128xf32>
      %55 = vector.shape_cast %51 : vector<8x1xi1> to vector<8x1xi1>
      %56 = vector.broadcast %55 : vector<8x1xi1> to vector<8x128xi1>
      %57 = arith.select %56, %47, %arg11 : vector<8x128xi1>, vector<8x128xf32>
      scf.yield %54, %57 : vector<8x128xf32>, vector<8x128xf32>
    }
    %c8_i32_11 = arith.constant 8 : i32
    %c0_12 = arith.constant 0 : index
    %c0_13 = arith.constant 0 : index
    %12 = vector.load %arg5[%c0_12, %c0_13] : memref<128x3xf32, #tpu.memory_space<vmem>>, vector<128x3xf32>
    %cst_14 = arith.constant dense<0.000000e+00> : vector<8x3xf32>
    %13 = tpu.matmul %11#0, %12, %cst_14 {dimension_numbers = #tpu.dot_dimension_numbers<[1], [0], [0], [1], [0, 0, 1, 1], [], []>} : vector<8x128xf32>, vector<128x3xf32>, vector<8x3xf32> -> vector<8x3xf32>
    %c0_15 = arith.constant 0 : index
    %c0_16 = arith.constant 0 : index
    %14 = vector.load %arg6[%c0_15, %c0_16] : memref<1x3xf32, #tpu.memory_space<vmem>>, vector<1x3xf32>
    %15 = vector.broadcast %14 : vector<1x3xf32> to vector<8x3xf32>
    %16 = arith.addf %13, %15 : vector<8x3xf32>
    %c0_17 = arith.constant 0 : index
    %c0_18 = arith.constant 0 : index
    %17 = vector.load %arg7[%c0_17, %c0_18] : memref<8x3xf32, #tpu.memory_space<vmem>>, vector<8x3xf32>
    tpu.vector_store %arg7[%c0_17, %c0_18], %16 {strides = array<i32>} : memref<8x3xf32, #tpu.memory_space<vmem>>, vector<8x3xf32>,
    return
  }
}

module attributes {stable_mosaic.version = 11 : i64} {
  func.func @transformer_layer_kernel(%arg0: i32, %arg1: memref<1x8x32xf32, #tpu.memory_space<vmem>>, %arg2: memref<32x96xf32, #tpu.memory_space<vmem>>, %arg3: memref<1x96xf32, #tpu.memory_space<vmem>>, %arg4: memref<32x32xf32, #tpu.memory_space<vmem>>, %arg5: memref<1x32xf32, #tpu.memory_space<vmem>>, %arg6: memref<1x32xf32, #tpu.memory_space<vmem>>, %arg7: memref<1x32xf32, #tpu.memory_space<vmem>>, %arg8: memref<32x64xf32, #tpu.memory_space<vmem>>, %arg9: memref<1x64xf32, #tpu.memory_space<vmem>>, %arg10: memref<64x32xf32, #tpu.memory_space<vmem>>, %arg11: memref<1x32xf32, #tpu.memory_space<vmem>>, %arg12: memref<1x32xf32, #tpu.memory_space<vmem>>, %arg13: memref<1x32xf32, #tpu.memory_space<vmem>>, %arg14: memref<1x8x32xf32, #tpu.memory_space<vmem>>) attributes {dimension_semantics = [#tpu.dimension_semantics<parallel>], iteration_bounds = array<i64: 2>, scalar_prefetch = 0 : i64, scratch_operands = 0 : i64, tpu.core_type = #tpu.core_type<tc>, window_params = [{transform_indices = @transform_0, window_bounds = array<i64: 1, 8, 32>}, {pipeline_mode = #tpu.pipeline_mode<synchronous>, transform_indices = @transform_1, window_bounds = array<i64: 32, 96>}, {pipeline_mode = #tpu.pipeline_mode<synchronous>, transform_indices = @transform_2, window_bounds = array<i64: 1, 96>}, {pipeline_mode = #tpu.pipeline_mode<synchronous>, transform_indices = @transform_3, window_bounds = array<i64: 32, 32>}, {pipeline_mode = #tpu.pipeline_mode<synchronous>, transform_indices = @transform_4, window_bounds = array<i64: 1, 32>}, {pipeline_mode = #tpu.pipeline_mode<synchronous>, transform_indices = @transform_5, window_bounds = array<i64: 1, 32>}, {pipeline_mode = #tpu.pipeline_mode<synchronous>, transform_indices = @transform_6, window_bounds = array<i64: 1, 32>}, {pipeline_mode = #tpu.pipeline_mode<synchronous>, transform_indices = @transform_7, window_bounds = array<i64: 32, 64>}, {pipeline_mode = #tpu.pipeline_mode<synchronous>, transform_indices = @transform_8, window_bounds = array<i64: 1, 64>}, {pipeline_mode = #tpu.pipeline_mode<synchronous>, transform_indices = @transform_9, window_bounds = array<i64: 64, 32>}, {pipeline_mode = #tpu.pipeline_mode<synchronous>, transform_indices = @transform_10, window_bounds = array<i64: 1, 32>}, {pipeline_mode = #tpu.pipeline_mode<synchronous>, transform_indices = @transform_11, window_bounds = array<i64: 1, 32>}, {pipeline_mode = #tpu.pipeline_mode<synchronous>, transform_indices = @transform_12, window_bounds = array<i64: 1, 32>}, {transform_indices = @transform_13, window_bounds = array<i64: 1, 8, 32>}]} {
    %c0 = arith.constant 0 : index
    %c0_0 = arith.constant 0 : index
    %c0_1 = arith.constant 0 : index
    %0 = vector.load %arg1[%c0, %c0_0, %c0_1] : memref<1x8x32xf32, #tpu.memory_space<vmem>>, vector<1x8x32xf32>
    %1 = vector.shape_cast %0 : vector<1x8x32xf32> to vector<8x32xf32>
    %c0_2 = arith.constant 0 : index
    %c0_3 = arith.constant 0 : index
    %2 = vector.load %arg2[%c0_2, %c0_3] : memref<32x96xf32, #tpu.memory_space<vmem>>, vector<32x96xf32>
    %cst = arith.constant dense<0.000000e+00> : vector<8x96xf32>
    %3 = tpu.matmul %1, %2, %cst {dimension_numbers = #tpu.dot_dimension_numbers<[1], [0], [0], [1], [0, 0, 1, 1], [], []>} : vector<8x32xf32>, vector<32x96xf32>, vector<8x96xf32> -> vector<8x96xf32>
    %c0_4 = arith.constant 0 : index
    %c0_5 = arith.constant 0 : index
    %4 = vector.load %arg3[%c0_4, %c0_5] : memref<1x96xf32, #tpu.memory_space<vmem>>, vector<1x96xf32>
    %5 = vector.broadcast %4 : vector<1x96xf32> to vector<8x96xf32>
    %6 = arith.addf %3, %5 : vector<8x96xf32>
    %7 = vector.shape_cast %6 : vector<8x96xf32> to vector<1x8x96xf32>
    %8 = vector.extract_strided_slice %7 {offsets = [0, 0, 0], sizes = [1, 8, 8], strides = [1, 1, 1]} : vector<1x8x96xf32> to vector<1x8x8xf32>
    %9 = vector.extract_strided_slice %7 {offsets = [0, 0, 32], sizes = [1, 8, 8], strides = [1, 1, 1]} : vector<1x8x96xf32> to vector<1x8x8xf32>
    %10 = vector.extract_strided_slice %7 {offsets = [0, 0, 64], sizes = [1, 8, 8], strides = [1, 1, 1]} : vector<1x8x96xf32> to vector<1x8x8xf32>
    "tpu.trace_start"() <{level = 10 : i32, message = "bqd,bkd->bqk"}> : () -> ()
    %cst_6 = arith.constant dense<0.000000e+00> : vector<1x8x8xf32>
    %11 = tpu.matmul %8, %9, %cst_6 {dimension_numbers = #tpu.dot_dimension_numbers<[2], [2], [1], [1], [0, 0, 0, 1, 1, 1], [0], [0]>} : vector<1x8x8xf32>, vector<1x8x8xf32>, vector<1x8x8xf32> -> vector<1x8x8xf32>
    "tpu.trace_stop"() : () -> ()
    %cst_7 = arith.constant 0.353553385 : f32
    %12 = vector.broadcast %cst_7 : f32 to vector<1x8x8xf32>
    %13 = arith.mulf %11, %12 : vector<1x8x8xf32>
    %cst_8 = arith.constant dense<0xFF800000> : vector<1x8xf32>
    %14 = vector.multi_reduction <maximumf>, %13, %cst_8 [2] : vector<1x8x8xf32> to vector<1x8xf32>
    %15 = vector.shape_cast %14 : vector<1x8xf32> to vector<1x8x1xf32>
    %16 = vector.broadcast %15 : vector<1x8x1xf32> to vector<1x8x8xf32>
    %17 = arith.subf %13, %16 : vector<1x8x8xf32>
    %18 = math.exp %17 : vector<1x8x8xf32>
    %cst_9 = arith.constant dense<0.000000e+00> : vector<1x8xf32>
    %19 = vector.multi_reduction <add>, %18, %cst_9 [2] : vector<1x8x8xf32> to vector<1x8xf32>
    %20 = vector.shape_cast %19 : vector<1x8xf32> to vector<1x8x1xf32>
    %21 = tpu.reciprocal %20 {approx = true} : vector<1x8x1xf32> -> vector<1x8x1xf32>
    %22 = vector.broadcast %21 : vector<1x8x1xf32> to vector<1x8x8xf32>
    %23 = arith.mulf %18, %22 : vector<1x8x8xf32>
    "tpu.trace_start"() <{level = 10 : i32, message = "bqk,bkd->bqd"}> : () -> ()
    %cst_10 = arith.constant dense<0.000000e+00> : vector<1x8x8xf32>
    %24 = tpu.matmul %23, %10, %cst_10 {dimension_numbers = #tpu.dot_dimension_numbers<[2], [1], [1], [2], [0, 0, 0, 1, 1, 2], [0], [0]>} : vector<1x8x8xf32>, vector<1x8x8xf32>, vector<1x8x8xf32> -> vector<1x8x8xf32>
    "tpu.trace_stop"() : () -> ()
    %25 = vector.extract_strided_slice %7 {offsets = [0, 0, 8], sizes = [1, 8, 8], strides = [1, 1, 1]} : vector<1x8x96xf32> to vector<1x8x8xf32>
    %26 = vector.extract_strided_slice %7 {offsets = [0, 0, 40], sizes = [1, 8, 8], strides = [1, 1, 1]} : vector<1x8x96xf32> to vector<1x8x8xf32>
    %27 = vector.extract_strided_slice %7 {offsets = [0, 0, 72], sizes = [1, 8, 8], strides = [1, 1, 1]} : vector<1x8x96xf32> to vector<1x8x8xf32>
    "tpu.trace_start"() <{level = 10 : i32, message = "bqd,bkd->bqk"}> : () -> ()
    %cst_11 = arith.constant dense<0.000000e+00> : vector<1x8x8xf32>
    %28 = tpu.matmul %25, %26, %cst_11 {dimension_numbers = #tpu.dot_dimension_numbers<[2], [2], [1], [1], [0, 0, 0, 1, 1, 1], [0], [0]>} : vector<1x8x8xf32>, vector<1x8x8xf32>, vector<1x8x8xf32> -> vector<1x8x8xf32>
    "tpu.trace_stop"() : () -> ()
    %cst_12 = arith.constant 0.353553385 : f32
    %29 = vector.broadcast %cst_12 : f32 to vector<1x8x8xf32>
    %30 = arith.mulf %28, %29 : vector<1x8x8xf32>
    %cst_13 = arith.constant dense<0xFF800000> : vector<1x8xf32>
    %31 = vector.multi_reduction <maximumf>, %30, %cst_13 [2] : vector<1x8x8xf32> to vector<1x8xf32>
    %32 = vector.shape_cast %31 : vector<1x8xf32> to vector<1x8x1xf32>
    %33 = vector.broadcast %32 : vector<1x8x1xf32> to vector<1x8x8xf32>
    %34 = arith.subf %30, %33 : vector<1x8x8xf32>
    %35 = math.exp %34 : vector<1x8x8xf32>
    %cst_14 = arith.constant dense<0.000000e+00> : vector<1x8xf32>
    %36 = vector.multi_reduction <add>, %35, %cst_14 [2] : vector<1x8x8xf32> to vector<1x8xf32>
    %37 = vector.shape_cast %36 : vector<1x8xf32> to vector<1x8x1xf32>
    %38 = tpu.reciprocal %37 {approx = true} : vector<1x8x1xf32> -> vector<1x8x1xf32>
    %39 = vector.broadcast %38 : vector<1x8x1xf32> to vector<1x8x8xf32>
    %40 = arith.mulf %35, %39 : vector<1x8x8xf32>
    "tpu.trace_start"() <{level = 10 : i32, message = "bqk,bkd->bqd"}> : () -> ()
    %cst_15 = arith.constant dense<0.000000e+00> : vector<1x8x8xf32>
    %41 = tpu.matmul %40, %27, %cst_15 {dimension_numbers = #tpu.dot_dimension_numbers<[2], [1], [1], [2], [0, 0, 0, 1, 1, 2], [0], [0]>} : vector<1x8x8xf32>, vector<1x8x8xf32>, vector<1x8x8xf32> -> vector<1x8x8xf32>
    "tpu.trace_stop"() : () -> ()
    %42 = vector.extract_strided_slice %7 {offsets = [0, 0, 16], sizes = [1, 8, 8], strides = [1, 1, 1]} : vector<1x8x96xf32> to vector<1x8x8xf32>
    %43 = vector.extract_strided_slice %7 {offsets = [0, 0, 48], sizes = [1, 8, 8], strides = [1, 1, 1]} : vector<1x8x96xf32> to vector<1x8x8xf32>
    %44 = vector.extract_strided_slice %7 {offsets = [0, 0, 80], sizes = [1, 8, 8], strides = [1, 1, 1]} : vector<1x8x96xf32> to vector<1x8x8xf32>
    "tpu.trace_start"() <{level = 10 : i32, message = "bqd,bkd->bqk"}> : () -> ()
    %cst_16 = arith.constant dense<0.000000e+00> : vector<1x8x8xf32>
    %45 = tpu.matmul %42, %43, %cst_16 {dimension_numbers = #tpu.dot_dimension_numbers<[2], [2], [1], [1], [0, 0, 0, 1, 1, 1], [0], [0]>} : vector<1x8x8xf32>, vector<1x8x8xf32>, vector<1x8x8xf32> -> vector<1x8x8xf32>
    "tpu.trace_stop"() : () -> ()
    %cst_17 = arith.constant 0.353553385 : f32
    %46 = vector.broadcast %cst_17 : f32 to vector<1x8x8xf32>
    %47 = arith.mulf %45, %46 : vector<1x8x8xf32>
    %cst_18 = arith.constant dense<0xFF800000> : vector<1x8xf32>
    %48 = vector.multi_reduction <maximumf>, %47, %cst_18 [2] : vector<1x8x8xf32> to vector<1x8xf32>
    %49 = vector.shape_cast %48 : vector<1x8xf32> to vector<1x8x1xf32>
    %50 = vector.broadcast %49 : vector<1x8x1xf32> to vector<1x8x8xf32>
    %51 = arith.subf %47, %50 : vector<1x8x8xf32>
    %52 = math.exp %51 : vector<1x8x8xf32>
    %cst_19 = arith.constant dense<0.000000e+00> : vector<1x8xf32>
    %53 = vector.multi_reduction <add>, %52, %cst_19 [2] : vector<1x8x8xf32> to vector<1x8xf32>
    %54 = vector.shape_cast %53 : vector<1x8xf32> to vector<1x8x1xf32>
    %55 = tpu.reciprocal %54 {approx = true} : vector<1x8x1xf32> -> vector<1x8x1xf32>
    %56 = vector.broadcast %55 : vector<1x8x1xf32> to vector<1x8x8xf32>
    %57 = arith.mulf %52, %56 : vector<1x8x8xf32>
    "tpu.trace_start"() <{level = 10 : i32, message = "bqk,bkd->bqd"}> : () -> ()
    %cst_20 = arith.constant dense<0.000000e+00> : vector<1x8x8xf32>
    %58 = tpu.matmul %57, %44, %cst_20 {dimension_numbers = #tpu.dot_dimension_numbers<[2], [1], [1], [2], [0, 0, 0, 1, 1, 2], [0], [0]>} : vector<1x8x8xf32>, vector<1x8x8xf32>, vector<1x8x8xf32> -> vector<1x8x8xf32>
    "tpu.trace_stop"() : () -> ()
    %59 = vector.extract_strided_slice %7 {offsets = [0, 0, 24], sizes = [1, 8, 8], strides = [1, 1, 1]} : vector<1x8x96xf32> to vector<1x8x8xf32>
    %60 = vector.extract_strided_slice %7 {offsets = [0, 0, 56], sizes = [1, 8, 8], strides = [1, 1, 1]} : vector<1x8x96xf32> to vector<1x8x8xf32>
    %61 = vector.extract_strided_slice %7 {offsets = [0, 0, 88], sizes = [1, 8, 8], strides = [1, 1, 1]} : vector<1x8x96xf32> to vector<1x8x8xf32>
    "tpu.trace_start"() <{level = 10 : i32, message = "bqd,bkd->bqk"}> : () -> ()
    %cst_21 = arith.constant dense<0.000000e+00> : vector<1x8x8xf32>
    %62 = tpu.matmul %59, %60, %cst_21 {dimension_numbers = #tpu.dot_dimension_numbers<[2], [2], [1], [1], [0, 0, 0, 1, 1, 1], [0], [0]>} : vector<1x8x8xf32>, vector<1x8x8xf32>, vector<1x8x8xf32> -> vector<1x8x8xf32>
    "tpu.trace_stop"() : () -> ()
    %cst_22 = arith.constant 0.353553385 : f32
    %63 = vector.broadcast %cst_22 : f32 to vector<1x8x8xf32>
    %64 = arith.mulf %62, %63 : vector<1x8x8xf32>
    %cst_23 = arith.constant dense<0xFF800000> : vector<1x8xf32>
    %65 = vector.multi_reduction <maximumf>, %64, %cst_23 [2] : vector<1x8x8xf32> to vector<1x8xf32>
    %66 = vector.shape_cast %65 : vector<1x8xf32> to vector<1x8x1xf32>
    %67 = vector.broadcast %66 : vector<1x8x1xf32> to vector<1x8x8xf32>
    %68 = arith.subf %64, %67 : vector<1x8x8xf32>
    %69 = math.exp %68 : vector<1x8x8xf32>
    %cst_24 = arith.constant dense<0.000000e+00> : vector<1x8xf32>
    %70 = vector.multi_reduction <add>, %69, %cst_24 [2] : vector<1x8x8xf32> to vector<1x8xf32>
    %71 = vector.shape_cast %70 : vector<1x8xf32> to vector<1x8x1xf32>
    %72 = tpu.reciprocal %71 {approx = true} : vector<1x8x1xf32> -> vector<1x8x1xf32>
    %73 = vector.broadcast %72 : vector<1x8x1xf32> to vector<1x8x8xf32>
    %74 = arith.mulf %69, %73 : vector<1x8x8xf32>
    "tpu.trace_start"() <{level = 10 : i32, message = "bqk,bkd->bqd"}> : () -> ()
    %cst_25 = arith.constant dense<0.000000e+00> : vector<1x8x8xf32>
    %75 = tpu.matmul %74, %61, %cst_25 {dimension_numbers = #tpu.dot_dimension_numbers<[2], [1], [1], [2], [0, 0, 0, 1, 1, 2], [0], [0]>} : vector<1x8x8xf32>, vector<1x8x8xf32>, vector<1x8x8xf32> -> vector<1x8x8xf32>
    "tpu.trace_stop"() : () -> ()
    %76 = tpu.concatenate %24, %41, %58, %75 in 2 : vector<1x8x8xf32>, vector<1x8x8xf32>, vector<1x8x8xf32>, vector<1x8x8xf32> -> vector<1x8x32xf32>
    %77 = vector.shape_cast %76 : vector<1x8x32xf32> to vector<8x32xf32>
    %c0_26 = arith.constant 0 : index
    %c0_27 = arith.constant 0 : index
    %78 = vector.load %arg4[%c0_26, %c0_27] : memref<32x32xf32, #tpu.memory_space<vmem>>, vector<32x32xf32>
    %cst_28 = arith.constant dense<0.000000e+00> : vector<8x32xf32>
    %79 = tpu.matmul %77, %78, %cst_28 {dimension_numbers = #tpu.dot_dimension_numbers<[1], [0], [0], [1], [0, 0, 1, 1], [], []>} : vector<8x32xf32>, vector<32x32xf32>, vector<8x32xf32> -> vector<8x32xf32>
    %c0_29 = arith.constant 0 : index
    %c0_30 = arith.constant 0 : index
    %80 = vector.load %arg5[%c0_29, %c0_30] : memref<1x32xf32, #tpu.memory_space<vmem>>, vector<1x32xf32>
    %81 = vector.broadcast %80 : vector<1x32xf32> to vector<8x32xf32>
    %82 = arith.addf %79, %81 : vector<8x32xf32>
    %83 = arith.addf %1, %82 : vector<8x32xf32>
    %c0_31 = arith.constant 0 : index
    %c0_32 = arith.constant 0 : index
    %84 = vector.load %arg6[%c0_31, %c0_32] : memref<1x32xf32, #tpu.memory_space<vmem>>, vector<1x32xf32>
    %c0_33 = arith.constant 0 : index
    %c0_34 = arith.constant 0 : index
    %85 = vector.load %arg7[%c0_33, %c0_34] : memref<1x32xf32, #tpu.memory_space<vmem>>, vector<1x32xf32>
    %cst_35 = arith.constant dense<0.000000e+00> : vector<8xf32>
    %86 = vector.multi_reduction <add>, %83, %cst_35 [1] : vector<8x32xf32> to vector<8xf32>
    %87 = vector.shape_cast %86 : vector<8xf32> to vector<8x1xf32>
    %cst_36 = arith.constant 3.200000e+01 : f32
    %88 = vector.broadcast %cst_36 : f32 to vector<8x1xf32>
    %89 = arith.divf %87, %88 : vector<8x1xf32>
    %90 = arith.mulf %83, %83 : vector<8x32xf32>
    %cst_37 = arith.constant dense<0.000000e+00> : vector<8xf32>
    %91 = vector.multi_reduction <add>, %90, %cst_37 [1] : vector<8x32xf32> to vector<8xf32>
    %92 = vector.shape_cast %91 : vector<8xf32> to vector<8x1xf32>
    %cst_38 = arith.constant 3.200000e+01 : f32
    %93 = vector.broadcast %cst_38 : f32 to vector<8x1xf32>
    %94 = arith.divf %92, %93 : vector<8x1xf32>
    %95 = arith.mulf %89, %89 : vector<8x1xf32>
    %96 = arith.subf %94, %95 : vector<8x1xf32>
    %97 = vector.broadcast %89 : vector<8x1xf32> to vector<8x32xf32>
    %98 = arith.subf %83, %97 : vector<8x32xf32>
    %cst_39 = arith.constant 9.99999974E-6 : f32
    %99 = vector.broadcast %cst_39 : f32 to vector<8x1xf32>
    %100 = arith.addf %96, %99 : vector<8x1xf32>
    %101 = math.rsqrt %100 : vector<8x1xf32>
    %102 = vector.broadcast %101 : vector<8x1xf32> to vector<8x32xf32>
    %103 = arith.mulf %98, %102 : vector<8x32xf32>
    %104 = vector.broadcast %84 : vector<1x32xf32> to vector<8x32xf32>
    %105 = arith.mulf %103, %104 : vector<8x32xf32>
    %106 = vector.broadcast %85 : vector<1x32xf32> to vector<8x32xf32>
    %107 = arith.addf %105, %106 : vector<8x32xf32>
    %c0_40 = arith.constant 0 : index
    %c0_41 = arith.constant 0 : index
    %108 = vector.load %arg8[%c0_40, %c0_41] : memref<32x64xf32, #tpu.memory_space<vmem>>, vector<32x64xf32>
    %cst_42 = arith.constant dense<0.000000e+00> : vector<8x64xf32>
    %109 = tpu.matmul %107, %108, %cst_42 {dimension_numbers = #tpu.dot_dimension_numbers<[1], [0], [0], [1], [0, 0, 1, 1], [], []>} : vector<8x32xf32>, vector<32x64xf32>, vector<8x64xf32> -> vector<8x64xf32>
    %c0_43 = arith.constant 0 : index
    %c0_44 = arith.constant 0 : index
    %110 = vector.load %arg9[%c0_43, %c0_44] : memref<1x64xf32, #tpu.memory_space<vmem>>, vector<1x64xf32>
    %111 = vector.broadcast %110 : vector<1x64xf32> to vector<8x64xf32>
    %112 = arith.addf %109, %111 : vector<8x64xf32>
    %cst_45 = arith.constant 0.000000e+00 : f32
    %113 = vector.broadcast %cst_45 : f32 to vector<8x64xf32>
    %114 = arith.maximumf %112, %113 : vector<8x64xf32>
    %c0_46 = arith.constant 0 : index
    %c0_47 = arith.constant 0 : index
    %115 = vector.load %arg10[%c0_46, %c0_47] : memref<64x32xf32, #tpu.memory_space<vmem>>, vector<64x32xf32>
    %cst_48 = arith.constant dense<0.000000e+00> : vector<8x32xf32>
    %116 = tpu.matmul %114, %115, %cst_48 {dimension_numbers = #tpu.dot_dimension_numbers<[1], [0], [0], [1], [0, 0, 1, 1], [], []>} : vector<8x64xf32>, vector<64x32xf32>, vector<8x32xf32> -> vector<8x32xf32>
    %c0_49 = arith.constant 0 : index
    %c0_50 = arith.constant 0 : index
    %117 = vector.load %arg11[%c0_49, %c0_50] : memref<1x32xf32, #tpu.memory_space<vmem>>, vector<1x32xf32>
    %118 = vector.broadcast %117 : vector<1x32xf32> to vector<8x32xf32>
    %119 = arith.addf %116, %118 : vector<8x32xf32>
    %120 = arith.addf %107, %119 : vector<8x32xf32>
    %c0_51 = arith.constant 0 : index
    %c0_52 = arith.constant 0 : index
    %121 = vector.load %arg12[%c0_51, %c0_52] : memref<1x32xf32, #tpu.memory_space<vmem>>, vector<1x32xf32>
    %c0_53 = arith.constant 0 : index
    %c0_54 = arith.constant 0 : index
    %122 = vector.load %arg13[%c0_53, %c0_54] : memref<1x32xf32, #tpu.memory_space<vmem>>, vector<1x32xf32>
    %cst_55 = arith.constant dense<0.000000e+00> : vector<8xf32>
    %123 = vector.multi_reduction <add>, %120, %cst_55 [1] : vector<8x32xf32> to vector<8xf32>
    %124 = vector.shape_cast %123 : vector<8xf32> to vector<8x1xf32>
    %cst_56 = arith.constant 3.200000e+01 : f32
    %125 = vector.broadcast %cst_56 : f32 to vector<8x1xf32>
    %126 = arith.divf %124, %125 : vector<8x1xf32>
    %127 = arith.mulf %120, %120 : vector<8x32xf32>
    %cst_57 = arith.constant dense<0.000000e+00> : vector<8xf32>
    %128 = vector.multi_reduction <add>, %127, %cst_57 [1] : vector<8x32xf32> to vector<8xf32>
    %129 = vector.shape_cast %128 : vector<8xf32> to vector<8x1xf32>
    %cst_58 = arith.constant 3.200000e+01 : f32
    %130 = vector.broadcast %cst_58 : f32 to vector<8x1xf32>
    %131 = arith.divf %129, %130 : vector<8x1xf32>
    %132 = arith.mulf %126, %126 : vector<8x1xf32>
    %133 = arith.subf %131, %132 : vector<8x1xf32>
    %134 = vector.broadcast %126 : vector<8x1xf32> to vector<8x32xf32>
    %135 = arith.subf %120, %134 : vector<8x32xf32>
    %cst_59 = arith.constant 9.99999974E-6 : f32
    %136 = vector.broadcast %cst_59 : f32 to vector<8x1xf32>
    %137 = arith.addf %133, %136 : vector<8x1xf32>
    %138 = math.rsqrt %137 : vector<8x1xf32>
    %139 = vector.broadcast %138 : vector<8x1xf32> to vector<8x32xf32>
    %140 = arith.mulf %135, %139 : vector<8x32xf32>
    %141 = vector.broadcast %121 : vector<1x32xf32> to vector<8x32xf32>
    %142 = arith.mulf %140, %141 : vector<8x32xf32>
    %143 = vector.broadcast %122 : vector<1x32xf32> to vector<8x32xf32>
    %144 = arith.addf %142, %143 : vector<8x32xf32>
    %145 = vector.shape_cast %144 : vector<8x32xf32> to vector<1x8x32xf32>
    %c0_60 = arith.constant 0 : index
    %c0_61 = arith.constant 0 : index
    %c0_62 = arith.constant 0 : index
    %146 = vector.load %arg14[%c0_60, %c0_61, %c0_62] : memref<1x8x32xf32, #tpu.memory_space<vmem>>, vector<1x8x32xf32>
    tpu.vector_store %arg14[%c0_60, %c0_61, %c0_62], %145 {strides = array<i32>} : memref<1x8x32xf32, #tpu.memory_space<vmem>>, vector<1x8x32xf32>,
    return
  }
  func.func @transform_0(%arg0: i32) -> (i32, i32, i32) {
    %c0_i32 = arith.constant 0 : i32
    %c0_i32_0 = arith.constant 0 : i32
    %c0_i32_1 = arith.constant 0 : i32
    return %arg0, %c0_i32, %c0_i32_0 : i32, i32, i32
  }
  func.func @transform_1(%arg0: i32) -> (i32, i32) {
    %c0_i32 = arith.constant 0 : i32
    %c0_i32_0 = arith.constant 0 : i32
    %c0_i32_1 = arith.constant 0 : i32
    return %c0_i32, %c0_i32_0 : i32, i32
  }
  func.func @transform_2(%arg0: i32) -> (i32, i32) {
    %c0_i32 = arith.constant 0 : i32
    %c0_i32_0 = arith.constant 0 : i32
    %c0_i32_1 = arith.constant 0 : i32
    return %c0_i32, %c0_i32_0 : i32, i32
  }
  func.func @transform_3(%arg0: i32) -> (i32, i32) {
    %c0_i32 = arith.constant 0 : i32
    %c0_i32_0 = arith.constant 0 : i32
    %c0_i32_1 = arith.constant 0 : i32
    return %c0_i32, %c0_i32_0 : i32, i32
  }
  func.func @transform_4(%arg0: i32) -> (i32, i32) {
    %c0_i32 = arith.constant 0 : i32
    %c0_i32_0 = arith.constant 0 : i32
    %c0_i32_1 = arith.constant 0 : i32
    return %c0_i32, %c0_i32_0 : i32, i32
  }
  func.func @transform_5(%arg0: i32) -> (i32, i32) {
    %c0_i32 = arith.constant 0 : i32
    %c0_i32_0 = arith.constant 0 : i32
    %c0_i32_1 = arith.constant 0 : i32
    return %c0_i32, %c0_i32_0 : i32, i32
  }
  func.func @transform_6(%arg0: i32) -> (i32, i32) {
    %c0_i32 = arith.constant 0 : i32
    %c0_i32_0 = arith.constant 0 : i32
    %c0_i32_1 = arith.constant 0 : i32
    return %c0_i32, %c0_i32_0 : i32, i32
  }
  func.func @transform_7(%arg0: i32) -> (i32, i32) {
    %c0_i32 = arith.constant 0 : i32
    %c0_i32_0 = arith.constant 0 : i32
    %c0_i32_1 = arith.constant 0 : i32
    return %c0_i32, %c0_i32_0 : i32, i32
  }
  func.func @transform_8(%arg0: i32) -> (i32, i32) {
    %c0_i32 = arith.constant 0 : i32
    %c0_i32_0 = arith.constant 0 : i32
    %c0_i32_1 = arith.constant 0 : i32
    return %c0_i32, %c0_i32_0 : i32, i32
  }
  func.func @transform_9(%arg0: i32) -> (i32, i32) {
    %c0_i32 = arith.constant 0 : i32
    %c0_i32_0 = arith.constant 0 : i32
    %c0_i32_1 = arith.constant 0 : i32
    return %c0_i32, %c0_i32_0 : i32, i32
  }
  func.func @transform_10(%arg0: i32) -> (i32, i32) {
    %c0_i32 = arith.constant 0 : i32
    %c0_i32_0 = arith.constant 0 : i32
    %c0_i32_1 = arith.constant 0 : i32
    return %c0_i32, %c0_i32_0 : i32, i32
  }
  func.func @transform_11(%arg0: i32) -> (i32, i32) {
    %c0_i32 = arith.constant 0 : i32
    %c0_i32_0 = arith.constant 0 : i32
    %c0_i32_1 = arith.constant 0 : i32
    return %c0_i32, %c0_i32_0 : i32, i32
  }
  func.func @transform_12(%arg0: i32) -> (i32, i32) {
    %c0_i32 = arith.constant 0 : i32
    %c0_i32_0 = arith.constant 0 : i32
    %c0_i32_1 = arith.constant 0 : i32
    return %c0_i32, %c0_i32_0 : i32, i32
  }
  func.func @transform_13(%arg0: i32) -> (i32, i32, i32) {
    %c0_i32 = arith.constant 0 : i32
    %c0_i32_0 = arith.constant 0 : i32
    %c0_i32_1 = arith.constant 0 : i32
    return %arg0, %c0_i32, %c0_i32_0 : i32, i32, i32
  }
}

</mosaic_0001>

<llo_original>
// kernel: forward.5
$region0: #{forward.5}
  #allocation0 [shape = 'u32[]', space=smem, size = 0x4, offset = 0x4, fixed_abs, tag = 'smem constant byte address 0x4 - core index']
  #allocation1 [shape = 'u32[144,128]{1,0:T(1,128)}', space=vmem, size = 0x12000, scoped, tag = 'internal scratch']
  #allocation2 [shape = 'f32[64,512]{1,0:T(8,128)}', space=vmem, size = 0x20000, scoped, tag = 'scratch operand']
  %s0 = inlined_call_operand.vmem [shape: f32[64,32], index: 0, kind: input, shape index: {}]
  %s1 = inlined_call_operand.vmem [shape: s32[8,1], index: 1, kind: input, shape index: {}]
  %s2 = inlined_call_operand.vmem [shape: f32[32,512], index: 2, kind: input, shape index: {}]
  %s3 = inlined_call_operand.vmem [shape: f32[128,512], index: 3, kind: input, shape index: {}]
  %s4 = inlined_call_operand.vmem [shape: f32[1,512], index: 4, kind: input, shape index: {}]
  %s5 = inlined_call_operand.vmem [shape: f32[128,3], index: 5, kind: input, shape index: {}]
  %s6 = inlined_call_operand.vmem [shape: f32[1,3], index: 6, kind: input, shape index: {}]
  %s7 = inlined_call_operand.vmem [shape: f32[8,3], index: 7, kind: output, shape index: {}]
  %s8 = sld [smem:[#allocation0]]
  $region45: #{forward.5} parent=0
    _
  %s10 = ssub.s32 1, %s8
  %s11 = scalar_select 0, %s10, %s8
  // Predicated region
  $region2: #{forward.5} parent=0 // pred_check
    _
  $region3: #{forward.5} parent=0 // pred_check_branch
    %13 = sbr.rel (0) target = $region5
  $region4: #{forward.5} parent=0 // pred_region
    _
  $region5: #{forward.5} parent=0 // pred_fallthru
    _
  // Predicated region
  $region6: #{forward.5} parent=0 // pred_check
    _
  $region7: #{forward.5} parent=0 // pred_check_branch
    %15 = sbr.rel (0) target = $region9
  $region8: #{forward.5} parent=0 // pred_region
    _
  $region9: #{forward.5} parent=0 // pred_fallthru
    _
  // Predicated region
  $region10: #{forward.5} parent=0 // pred_check
    _
  $region11: #{forward.5} parent=0 // pred_check_branch
    %17 = sbr.rel (0) target = $region13
  $region12: #{forward.5} parent=0 // pred_region
    _
  $region13: #{forward.5} parent=0 // pred_fallthru
    _
  // Predicated region
  $region14: #{forward.5} parent=0 // pred_check
    _
  $region15: #{forward.5} parent=0 // pred_check_branch
    %19 = sbr.rel (0) target = $region17
  $region16: #{forward.5} parent=0 // pred_region
    _
  $region17: #{forward.5} parent=0 // pred_fallthru
    _
  // Predicated region
  $region18: #{forward.5} parent=0 // pred_check
    _
  $region19: #{forward.5} parent=0 // pred_check_branch
    %21 = sbr.rel (0) target = $region21
  $region20: #{forward.5} parent=0 // pred_region
    _
  $region21: #{forward.5} parent=0 // pred_fallthru
    _
  // Predicated region
  $region22: #{forward.5} parent=0 // pred_check
    _
  $region23: #{forward.5} parent=0 // pred_check_branch
    %23 = sbr.rel (0) target = $region25
  $region24: #{forward.5} parent=0 // pred_region
    _
  $region25: #{forward.5} parent=0 // pred_fallthru
    _
  // Predicated region
  $region26: #{forward.5} parent=0 // pred_check
    _
  $region27: #{forward.5} parent=0 // pred_check_branch
    %25 = sbr.rel (0) target = $region29
  $region28: #{forward.5} parent=0 // pred_region
    _
  $region29: #{forward.5} parent=0 // pred_fallthru
    _
  %v26 = vld [vmem:[%s0] sm:$0xff]
  %v27 = vld [vmem:[%s0 + $0x8] sm:$0xff]
  %v28 = vld [vmem:[%s0 + $0x10] sm:$0xff]
  %v29 = vld [vmem:[%s0 + $0x18] sm:$0xff]
  %v30 = vld [vmem:[%s0 + $0x20] sm:$0xff]
  %v31 = vld [vmem:[%s0 + $0x28] sm:$0xff]
  %v32 = vld [vmem:[%s0 + $0x30] sm:$0xff]
  %v33 = vld [vmem:[%s0 + $0x38] sm:$0xff]
  %v34 = vld [vmem:[%s2] sm:$0xff]
  %v35 = vld [vmem:[%s2 + $0x8] sm:$0xff]
  %v36 = vld [vmem:[%s2 + $0x10] sm:$0xff]
  %v37 = vld [vmem:[%s2 + $0x18] sm:$0xff]
  %v38 = vld [vmem:[%s2 + $0x20] sm:$0xff]
  %v39 = vld [vmem:[%s2 + $0x28] sm:$0xff]
  %v40 = vld [vmem:[%s2 + $0x30] sm:$0xff]
  %v41 = vld [vmem:[%s2 + $0x38] sm:$0xff]
  %v42 = vld [vmem:[%s2 + $0x40] sm:$0xff]
  %v43 = vld [vmem:[%s2 + $0x48] sm:$0xff]
  %v44 = vld [vmem:[%s2 + $0x50] sm:$0xff]
  %v45 = vld [vmem:[%s2 + $0x58] sm:$0xff]
  %v46 = vld [vmem:[%s2 + $0x60] sm:$0xff]
  %v47 = vld [vmem:[%s2 + $0x68] sm:$0xff]
  %v48 = vld [vmem:[%s2 + $0x70] sm:$0xff]
  %v49 = vld [vmem:[%s2 + $0x78] sm:$0xff]
  %v50 = vld [vmem:[%s4] sm:$0xf]
  %v52 = vlaneseq
  %v53 = vshrl.u32 %v52, 7
  %v54 = vsub.s32 0, %v53
  %v55 = vrot.slane %v50, %v54
  %v56 = vlaneseq
  %v57 = vshrl.u32 %v56, 7
  %v58 = vsub.s32 1, %v57
  %v59 = vrot.slane %v50, %v58
  %v60 = vlaneseq
  %v61 = vshrl.u32 %v60, 7
  %v62 = vsub.s32 2, %v61
  %v63 = vrot.slane %v50, %v62
  %v64 = vlaneseq
  %v65 = vshrl.u32 %v64, 7
  %v66 = vsub.s32 3, %v65
  %v67 = vrot.slane %v50, %v66
  %vm72 = vcmask 261120
  %v74 = vsel %vm72, %v26, 0
  %v77 = vsel %vm72, %v27, 0
  %v80 = vsel %vm72, %v28, 0
  %v83 = vsel %vm72, %v29, 0
  %v86 = vsel %vm72, %v30, 0
  %v89 = vsel %vm72, %v31, 0
  %v92 = vsel %vm72, %v32, 0
  %v95 = vsel %vm72, %v33, 0
  %97 = vmatprep.subr.mxu0 %v35
  %98 = vmatpush1.msra.mxu0 %v34
  %99 = vmatprep.subr.mxu0 %v39
  %100 = vmatpush1.msra.mxu0 %v38
  %101 = vmatprep.subr.mxu0 %v43
  %102 = vmatpush1.msra.mxu0 %v42
  %103 = vmatprep.subr.mxu0 %v47
  %104 = vmatpush1.msra.mxu0 %v46
  %105 = vmatprep.subr.mxu0 0.0
  %106 = vmatpush1.msra.mxu0 0.0
  %107 = vmatprep.subr.mxu0 0.0
  %108 = vmatpush1.msra.mxu0 0.0
  %109 = vmatprep.subr.mxu0 0.0
  %110 = vmatpush1.msra.mxu0 0.0
  %111 = vmatprep.subr.mxu0 0.0
  %112 = vmatpush1.msra.mxu0 0.0
  %113 = vmatprep.subr.mxu0 0.0
  %114 = vmatpush1.msra.mxu0 0.0
  %115 = vmatprep.subr.mxu0 0.0
  %116 = vmatpush1.msra.mxu0 0.0
  %117 = vmatprep.subr.mxu0 0.0
  %118 = vmatpush1.msra.mxu0 0.0
  %119 = vmatprep.subr.mxu0 0.0
  %120 = vmatpush1.msra.mxu0 0.0
  %121 = vmatprep.subr.mxu0 0.0
  %122 = vmatpush1.msra.mxu0 0.0
  %123 = vmatprep.subr.mxu0 0.0
  %124 = vmatpush1.msra.mxu0 0.0
  %125 = vmatprep.subr.mxu0 0.0
  %126 = vmatpush1.msra.mxu0 0.0
  %127 = vmatprep.subr.mxu0 0.0
  %128 = vmatpush1.msra.mxu0 0.0
  %129 = vmatprep.subr.mxu0 0.0
  %130 = vmatpush1.msra.mxu0 0.0
  %131 = vmatprep.subr.mxu0 0.0
  %132 = vmatpush1.msra.mxu0 0.0
  %133 = vmatprep.subr.mxu0 0.0
  %134 = vmatpush1.msra.mxu0 0.0
  %135 = vmatprep.subr.mxu0 0.0
  %136 = vmatpush1.msra.mxu0 0.0
  %137 = vmatprep.subr.mxu0 0.0
  %138 = vmatpush1.msra.mxu0 0.0
  %139 = vmatprep.subr.mxu0 0.0
  %140 = vmatpush1.msra.mxu0 0.0
  %141 = vmatprep.subr.mxu0 0.0
  %142 = vmatpush1.msra.mxu0 0.0
  %143 = vmatprep.subr.mxu0 0.0
  %144 = vmatpush1.msra.mxu0 0.0
  %145 = vmatprep.subr.mxu0 0.0
  %146 = vmatpush1.msra.mxu0 0.0
  %147 = vmatprep.subr.mxu0 0.0
  %148 = vmatpush1.msra.mxu0 0.0
  %149 = vmatprep.subr.mxu0 0.0
  %150 = vmatpush1.msra.mxu0 0.0
  %151 = vmatprep.subr.mxu0 0.0
  %152 = vmatpush1.msra.mxu0 0.0
  %153 = vmatprep.subr.mxu0 0.0
  %154 = vmatpush1.msra.mxu0 0.0
  %155 = vmatprep.subr.mxu0 0.0
  %156 = vmatpush1.msra.mxu0 0.0
  %157 = vmatprep.subr.mxu0 0.0
  %158 = vmatpush1.msra.mxu0 0.0
  %159 = vmatprep.subr.mxu0 0.0
  %160 = vmatpush1.msra.mxu0 0.0
  %161 = vmatprep.mubr.f32.mxu0 0.0
  %162 = vmatmul.mubr.f32.gmra.mrb[0].mxu0 %v74
  %v163 = vpop.f32.mrb[0].mxu0
  %v164 = vadd.f32 %v55, %v163
  %v165 = vpop.f32.mrb[0].mxu0
  %v166 = vadd.f32 %v59, %v165
  %167 = vmatprep.mubr.f32.mxu0 0.0
  %168 = vmatmul.mubr.f32.gmra.mrb[0].mxu0 %v77
  %v169 = vpop.f32.mrb[0].mxu0
  %v170 = vadd.f32 %v55, %v169
  %v171 = vpop.f32.mrb[0].mxu0
  %v172 = vadd.f32 %v59, %v171
  %173 = vmatprep.mubr.f32.mxu0 0.0
  %174 = vmatmul.mubr.f32.gmra.mrb[0].mxu0 %v80
  %v175 = vpop.f32.mrb[0].mxu0
  %v176 = vadd.f32 %v55, %v175
  %v177 = vpop.f32.mrb[0].mxu0
  %v178 = vadd.f32 %v59, %v177
  %179 = vmatprep.mubr.f32.mxu0 0.0
  %180 = vmatmul.mubr.f32.gmra.mrb[0].mxu0 %v83
  %v181 = vpop.f32.mrb[0].mxu0
  %v182 = vadd.f32 %v55, %v181
  %v183 = vpop.f32.mrb[0].mxu0
  %v184 = vadd.f32 %v59, %v183
  %185 = vmatprep.mubr.f32.mxu0 0.0
  %186 = vmatmul.mubr.f32.gmra.mrb[0].mxu0 %v86
  %v187 = vpop.f32.mrb[0].mxu0
  %v188 = vadd.f32 %v55, %v187
  %v189 = vpop.f32.mrb[0].mxu0
  %v190 = vadd.f32 %v59, %v189
  %191 = vmatprep.mubr.f32.mxu0 0.0
  %192 = vmatmul.mubr.f32.gmra.mrb[0].mxu0 %v89
  %v193 = vpop.f32.mrb[0].mxu0
  %v194 = vadd.f32 %v55, %v193
  %v195 = vpop.f32.mrb[0].mxu0
  %v196 = vadd.f32 %v59, %v195
  %197 = vmatprep.mubr.f32.mxu0 0.0
  %198 = vmatmul.mubr.f32.gmra.mrb[0].mxu0 %v92
  %v199 = vpop.f32.mrb[0].mxu0
  %v200 = vadd.f32 %v55, %v199
  %v201 = vpop.f32.mrb[0].mxu0
  %v202 = vadd.f32 %v59, %v201
  %203 = vmatprep.mubr.f32.mxu0 0.0
  %204 = vmatmul.mubr.f32.gmra.mrb[0].mxu0 %v95
  %v205 = vpop.f32.mrb[0].mxu0
  %v206 = vadd.f32 %v55, %v205
  %v207 = vpop.f32.mrb[0].mxu0
  %v208 = vadd.f32 %v59, %v207
  %209 = vdwg.mxu0
  %210 = vmatprep.subr.mxu0 %v37
  %211 = vmatpush1.msra.mxu0 %v36
  %212 = vmatprep.subr.mxu0 %v41
  %213 = vmatpush1.msra.mxu0 %v40
  %214 = vmatprep.subr.mxu0 %v45
  %215 = vmatpush1.msra.mxu0 %v44
  %216 = vmatprep.subr.mxu0 %v49
  %217 = vmatpush1.msra.mxu0 %v48
  %218 = vmatprep.subr.mxu0 0.0
  %219 = vmatpush1.msra.mxu0 0.0
  %220 = vmatprep.subr.mxu0 0.0
  %221 = vmatpush1.msra.mxu0 0.0
  %222 = vmatprep.subr.mxu0 0.0
  %223 = vmatpush1.msra.mxu0 0.0
  %224 = vmatprep.subr.mxu0 0.0
  %225 = vmatpush1.msra.mxu0 0.0
  %226 = vmatprep.subr.mxu0 0.0
  %227 = vmatpush1.msra.mxu0 0.0
  %228 = vmatprep.subr.mxu0 0.0
  %229 = vmatpush1.msra.mxu0 0.0
  %230 = vmatprep.subr.mxu0 0.0
  %231 = vmatpush1.msra.mxu0 0.0
  %232 = vmatprep.subr.mxu0 0.0
  %233 = vmatpush1.msra.mxu0 0.0
  %234 = vmatprep.subr.mxu0 0.0
  %235 = vmatpush1.msra.mxu0 0.0
  %236 = vmatprep.subr.mxu0 0.0
  %237 = vmatpush1.msra.mxu0 0.0
  %238 = vmatprep.subr.mxu0 0.0
  %239 = vmatpush1.msra.mxu0 0.0
  %240 = vmatprep.subr.mxu0 0.0
  %241 = vmatpush1.msra.mxu0 0.0
  %242 = vmatprep.subr.mxu0 0.0
  %243 = vmatpush1.msra.mxu0 0.0
  %244 = vmatprep.subr.mxu0 0.0
  %245 = vmatpush1.msra.mxu0 0.0
  %246 = vmatprep.subr.mxu0 0.0
  %247 = vmatpush1.msra.mxu0 0.0
  %248 = vmatprep.subr.mxu0 0.0
  %249 = vmatpush1.msra.mxu0 0.0
  %250 = vmatprep.subr.mxu0 0.0
  %251 = vmatpush1.msra.mxu0 0.0
  %252 = vmatprep.subr.mxu0 0.0
  %253 = vmatpush1.msra.mxu0 0.0
  %254 = vmatprep.subr.mxu0 0.0
  %255 = vmatpush1.msra.mxu0 0.0
  %256 = vmatprep.subr.mxu0 0.0
  %257 = vmatpush1.msra.mxu0 0.0
  %258 = vmatprep.subr.mxu0 0.0
  %259 = vmatpush1.msra.mxu0 0.0
  %260 = vmatprep.subr.mxu0 0.0
  %261 = vmatpush1.msra.mxu0 0.0
  %262 = vmatprep.subr.mxu0 0.0
  %263 = vmatpush1.msra.mxu0 0.0
  %264 = vmatprep.subr.mxu0 0.0
  %265 = vmatpush1.msra.mxu0 0.0
  %266 = vmatprep.subr.mxu0 0.0
  %267 = vmatpush1.msra.mxu0 0.0
  %268 = vmatprep.subr.mxu0 0.0
  %269 = vmatpush1.msra.mxu0 0.0
  %270 = vmatprep.subr.mxu0 0.0
  %271 = vmatpush1.msra.mxu0 0.0
  %272 = vmatprep.subr.mxu0 0.0
  %273 = vmatpush1.msra.mxu0 0.0
  %274 = vmatprep.mubr.f32.mxu0 0.0
  %275 = vmatmul.mubr.f32.gmra.mrb[0].mxu0 %v74
  %v276 = vpop.f32.mrb[0].mxu0
  %v277 = vadd.f32 %v63, %v276
  %v278 = vpop.f32.mrb[0].mxu0
  %v279 = vadd.f32 %v67, %v278
  %280 = vmatprep.mubr.f32.mxu0 0.0
  %281 = vmatmul.mubr.f32.gmra.mrb[0].mxu0 %v77
  %v282 = vpop.f32.mrb[0].mxu0
  %v283 = vadd.f32 %v63, %v282
  %v284 = vpop.f32.mrb[0].mxu0
  %v285 = vadd.f32 %v67, %v284
  %286 = vmatprep.mubr.f32.mxu0 0.0
  %287 = vmatmul.mubr.f32.gmra.mrb[0].mxu0 %v80
  %v288 = vpop.f32.mrb[0].mxu0
  %v289 = vadd.f32 %v63, %v288
  %v290 = vpop.f32.mrb[0].mxu0
  %v291 = vadd.f32 %v67, %v290
  %292 = vmatprep.mubr.f32.mxu0 0.0
  %293 = vmatmul.mubr.f32.gmra.mrb[0].mxu0 %v83
  %v294 = vpop.f32.mrb[0].mxu0
  %v295 = vadd.f32 %v63, %v294
  %v296 = vpop.f32.mrb[0].mxu0
  %v297 = vadd.f32 %v67, %v296
  %298 = vmatprep.mubr.f32.mxu0 0.0
  %299 = vmatmul.mubr.f32.gmra.mrb[0].mxu0 %v86
  %v300 = vpop.f32.mrb[0].mxu0
  %v301 = vadd.f32 %v63, %v300
  %v302 = vpop.f32.mrb[0].mxu0
  %v303 = vadd.f32 %v67, %v302
  %304 = vmatprep.mubr.f32.mxu0 0.0
  %305 = vmatmul.mubr.f32.gmra.mrb[0].mxu0 %v89
  %v306 = vpop.f32.mrb[0].mxu0
  %v307 = vadd.f32 %v63, %v306
  %v308 = vpop.f32.mrb[0].mxu0
  %v309 = vadd.f32 %v67, %v308
  %310 = vmatprep.mubr.f32.mxu0 0.0
  %311 = vmatmul.mubr.f32.gmra.mrb[0].mxu0 %v92
  %v312 = vpop.f32.mrb[0].mxu0
  %v313 = vadd.f32 %v63, %v312
  %v314 = vpop.f32.mrb[0].mxu0
  %v315 = vadd.f32 %v67, %v314
  %316 = vmatprep.mubr.f32.mxu0 0.0
  %317 = vmatmul.mubr.f32.gmra.mrb[0].mxu0 %v95
  %v318 = vpop.f32.mrb[0].mxu0
  %v319 = vadd.f32 %v63, %v318
  %v320 = vpop.f32.mrb[0].mxu0
  %v321 = vadd.f32 %v67, %v320
  %322 = vdwg.mxu0
  %323 = vst [vmem:[#allocation2] sm:$0xff] %v164
  %324 = vst [vmem:[#allocation2 + $0x8] sm:$0xff] %v166
  %325 = vst [vmem:[#allocation2 + $0x10] sm:$0xff] %v277
  %326 = vst [vmem:[#allocation2 + $0x18] sm:$0xff] %v279
  %327 = vst [vmem:[#allocation2 + $0x20] sm:$0xff] %v170
  %328 = vst [vmem:[#allocation2 + $0x28] sm:$0xff] %v172
  %329 = vst [vmem:[#allocation2 + $0x30] sm:$0xff] %v283
  %330 = vst [vmem:[#allocation2 + $0x38] sm:$0xff] %v285
  %331 = vst [vmem:[#allocation2 + $0x40] sm:$0xff] %v176
  %332 = vst [vmem:[#allocation2 + $0x48] sm:$0xff] %v178
  %333 = vst [vmem:[#allocation2 + $0x50] sm:$0xff] %v289
  %334 = vst [vmem:[#allocation2 + $0x58] sm:$0xff] %v291
  %335 = vst [vmem:[#allocation2 + $0x60] sm:$0xff] %v182
  %336 = vst [vmem:[#allocation2 + $0x68] sm:$0xff] %v184
  %337 = vst [vmem:[#allocation2 + $0x70] sm:$0xff] %v295
  %338 = vst [vmem:[#allocation2 + $0x78] sm:$0xff] %v297
  %339 = vst [vmem:[#allocation2 + $0x80] sm:$0xff] %v188
  %340 = vst [vmem:[#allocation2 + $0x88] sm:$0xff] %v190
  %341 = vst [vmem:[#allocation2 + $0x90] sm:$0xff] %v301
  %342 = vst [vmem:[#allocation2 + $0x98] sm:$0xff] %v303
  %343 = vst [vmem:[#allocation2 + $0xa0] sm:$0xff] %v194
  %344 = vst [vmem:[#allocation2 + $0xa8] sm:$0xff] %v196
  %345 = vst [vmem:[#allocation2 + $0xb0] sm:$0xff] %v307
  %346 = vst [vmem:[#allocation2 + $0xb8] sm:$0xff] %v309
  %347 = vst [vmem:[#allocation2 + $0xc0] sm:$0xff] %v200
  %348 = vst [vmem:[#allocation2 + $0xc8] sm:$0xff] %v202
  %349 = vst [vmem:[#allocation2 + $0xd0] sm:$0xff] %v313
  %350 = vst [vmem:[#allocation2 + $0xd8] sm:$0xff] %v315
  %351 = vst [vmem:[#allocation2 + $0xe0] sm:$0xff] %v206
  %352 = vst [vmem:[#allocation2 + $0xe8] sm:$0xff] %v208
  %353 = vst [vmem:[#allocation2 + $0xf0] sm:$0xff] %v319
  %354 = vst [vmem:[#allocation2 + $0xf8] sm:$0xff] %v321
  %v355 = vld [vmem:[%s1] sm:$0xff]
  loop: start=0, step=1, limit=8
  $region30: #{forward.5} parent=0 // loop_pre_header
    _
  $region31: #{forward.5} parent=0 // loop_header
    %s357 = sphi 0, %s361
    %p358 = scmp.ge.s32.totalorder %s357, 8
    %v362 = vphi 0.0, %v615
    %v363 = vphi 0.0, %v616
  $region32: #{forward.5} parent=0 // loop_header_branch
    %360 = sbr.rel (%p358) target = $region36
  $region33: #{forward.5} parent=0 // loop_body
    %s364 = smul.u32 %s357, 8
    %s365 = sshra.s32 %s364, 3
    %s366 = sand.u32 %s364, 7
    %s367 = smul.u32 %s365, 4
    %s368 = smul.addr %s367, 8
    %s369 = scalar_lea.vmem [#allocation2], %s368
    %v370 = vld [vmem:[%s369] sm:$0xff]
    %v371 = vld [vmem:[%s369 + $0x8] sm:$0xff]
    %v372 = vld [vmem:[%s369 + $0x10] sm:$0xff]
    %v373 = vld [vmem:[%s369 + $0x18] sm:$0xff]
    %v374 = vld [vmem:[%s3] sm:$0xff]
    %v375 = vld [vmem:[%s3 + $0x8] sm:$0xff]
    %v376 = vld [vmem:[%s3 + $0x10] sm:$0xff]
    %v377 = vld [vmem:[%s3 + $0x18] sm:$0xff]
    %v378 = vld [vmem:[%s3 + $0x20] sm:$0xff]
    %v379 = vld [vmem:[%s3 + $0x28] sm:$0xff]
    %v380 = vld [vmem:[%s3 + $0x30] sm:$0xff]
    %v381 = vld [vmem:[%s3 + $0x38] sm:$0xff]
    %v382 = vld [vmem:[%s3 + $0x40] sm:$0xff]
    %v383 = vld [vmem:[%s3 + $0x48] sm:$0xff]
    %v384 = vld [vmem:[%s3 + $0x50] sm:$0xff]
    %v385 = vld [vmem:[%s3 + $0x58] sm:$0xff]
    %v386 = vld [vmem:[%s3 + $0x60] sm:$0xff]
    %v387 = vld [vmem:[%s3 + $0x68] sm:$0xff]
    %v388 = vld [vmem:[%s3 + $0x70] sm:$0xff]
    %v389 = vld [vmem:[%s3 + $0x78] sm:$0xff]
    %v390 = vld [vmem:[%s3 + $0x80] sm:$0xff]
    %v391 = vld [vmem:[%s3 + $0x88] sm:$0xff]
    %v392 = vld [vmem:[%s3 + $0x90] sm:$0xff]
    %v393 = vld [vmem:[%s3 + $0x98] sm:$0xff]
    %v394 = vld [vmem:[%s3 + $0xa0] sm:$0xff]
    %v395 = vld [vmem:[%s3 + $0xa8] sm:$0xff]
    %v396 = vld [vmem:[%s3 + $0xb0] sm:$0xff]
    %v397 = vld [vmem:[%s3 + $0xb8] sm:$0xff]
    %v398 = vld [vmem:[%s3 + $0xc0] sm:$0xff]
    %v399 = vld [vmem:[%s3 + $0xc8] sm:$0xff]
    %v400 = vld [vmem:[%s3 + $0xd0] sm:$0xff]
    %v401 = vld [vmem:[%s3 + $0xd8] sm:$0xff]
    %v402 = vld [vmem:[%s3 + $0xe0] sm:$0xff]
    %v403 = vld [vmem:[%s3 + $0xe8] sm:$0xff]
    %v404 = vld [vmem:[%s3 + $0xf0] sm:$0xff]
    %v405 = vld [vmem:[%s3 + $0xf8] sm:$0xff]
    %v406 = vld [vmem:[%s3 + $0x100] sm:$0xff]
    %v407 = vld [vmem:[%s3 + $0x108] sm:$0xff]
    %v408 = vld [vmem:[%s3 + $0x110] sm:$0xff]
    %v409 = vld [vmem:[%s3 + $0x118] sm:$0xff]
    %v410 = vld [vmem:[%s3 + $0x120] sm:$0xff]
    %v411 = vld [vmem:[%s3 + $0x128] sm:$0xff]
    %v412 = vld [vmem:[%s3 + $0x130] sm:$0xff]
    %v413 = vld [vmem:[%s3 + $0x138] sm:$0xff]
    %v414 = vld [vmem:[%s3 + $0x140] sm:$0xff]
    %v415 = vld [vmem:[%s3 + $0x148] sm:$0xff]
    %v416 = vld [vmem:[%s3 + $0x150] sm:$0xff]
    %v417 = vld [vmem:[%s3 + $0x158] sm:$0xff]
    %v418 = vld [vmem:[%s3 + $0x160] sm:$0xff]
    %v419 = vld [vmem:[%s3 + $0x168] sm:$0xff]
    %v420 = vld [vmem:[%s3 + $0x170] sm:$0xff]
    %v421 = vld [vmem:[%s3 + $0x178] sm:$0xff]
    %v422 = vld [vmem:[%s3 + $0x180] sm:$0xff]
    %v423 = vld [vmem:[%s3 + $0x188] sm:$0xff]
    %v424 = vld [vmem:[%s3 + $0x190] sm:$0xff]
    %v425 = vld [vmem:[%s3 + $0x198] sm:$0xff]
    %v426 = vld [vmem:[%s3 + $0x1a0] sm:$0xff]
    %v427 = vld [vmem:[%s3 + $0x1a8] sm:$0xff]
    %v428 = vld [vmem:[%s3 + $0x1b0] sm:$0xff]
    %v429 = vld [vmem:[%s3 + $0x1b8] sm:$0xff]
    %v430 = vld [vmem:[%s3 + $0x1c0] sm:$0xff]
    %v431 = vld [vmem:[%s3 + $0x1c8] sm:$0xff]
    %v432 = vld [vmem:[%s3 + $0x1d0] sm:$0xff]
    %v433 = vld [vmem:[%s3 + $0x1d8] sm:$0xff]
    %v434 = vld [vmem:[%s3 + $0x1e0] sm:$0xff]
    %v435 = vld [vmem:[%s3 + $0x1e8] sm:$0xff]
    %v436 = vld [vmem:[%s3 + $0x1f0] sm:$0xff]
    %v437 = vld [vmem:[%s3 + $0x1f8] sm:$0xff]
    %438 = vmatprep.subr.mxu0 %v375
    %439 = vmatpush1.msra.mxu0 %v374
    %440 = vmatprep.subr.mxu0 %v379
    %441 = vmatpush1.msra.mxu0 %v378
    %442 = vmatprep.subr.mxu0 %v383
    %443 = vmatpush1.msra.mxu0 %v382
    %444 = vmatprep.subr.mxu0 %v387
    %445 = vmatpush1.msra.mxu0 %v386
    %446 = vmatprep.subr.mxu0 %v391
    %447 = vmatpush1.msra.mxu0 %v390
    %448 = vmatprep.subr.mxu0 %v395
    %449 = vmatpush1.msra.mxu0 %v394
    %450 = vmatprep.subr.mxu0 %v399
    %451 = vmatpush1.msra.mxu0 %v398
    %452 = vmatprep.subr.mxu0 %v403
    %453 = vmatpush1.msra.mxu0 %v402
    %454 = vmatprep.subr.mxu0 %v407
    %455 = vmatpush1.msra.mxu0 %v406
    %456 = vmatprep.subr.mxu0 %v411
    %457 = vmatpush1.msra.mxu0 %v410
    %458 = vmatprep.subr.mxu0 %v415
    %459 = vmatpush1.msra.mxu0 %v414
    %460 = vmatprep.subr.mxu0 %v419
    %461 = vmatpush1.msra.mxu0 %v418
    %462 = vmatprep.subr.mxu0 %v423
    %463 = vmatpush1.msra.mxu0 %v422
    %464 = vmatprep.subr.mxu0 %v427
    %465 = vmatpush1.msra.mxu0 %v426
    %466 = vmatprep.subr.mxu0 %v431
    %467 = vmatpush1.msra.mxu0 %v430
    %468 = vmatprep.subr.mxu0 %v435
    %469 = vmatpush1.msra.mxu0 %v434
    %470 = vmatprep.subr.mxu0 0.0
    %471 = vmatpush1.msra.mxu0 0.0
    %472 = vmatprep.subr.mxu0 0.0
    %473 = vmatpush1.msra.mxu0 0.0
    %474 = vmatprep.subr.mxu0 0.0
    %475 = vmatpush1.msra.mxu0 0.0
    %476 = vmatprep.subr.mxu0 0.0
    %477 = vmatpush1.msra.mxu0 0.0
    %478 = vmatprep.subr.mxu0 0.0
    %479 = vmatpush1.msra.mxu0 0.0
    %480 = vmatprep.subr.mxu0 0.0
    %481 = vmatpush1.msra.mxu0 0.0
    %482 = vmatprep.subr.mxu0 0.0
    %483 = vmatpush1.msra.mxu0 0.0
    %484 = vmatprep.subr.mxu0 0.0
    %485 = vmatpush1.msra.mxu0 0.0
    %486 = vmatprep.subr.mxu0 0.0
    %487 = vmatpush1.msra.mxu0 0.0
    %488 = vmatprep.subr.mxu0 0.0
    %489 = vmatpush1.msra.mxu0 0.0
    %490 = vmatprep.subr.mxu0 0.0
    %491 = vmatpush1.msra.mxu0 0.0
    %492 = vmatprep.subr.mxu0 0.0
    %493 = vmatpush1.msra.mxu0 0.0
    %494 = vmatprep.subr.mxu0 0.0
    %495 = vmatpush1.msra.mxu0 0.0
    %496 = vmatprep.subr.mxu0 0.0
    %497 = vmatpush1.msra.mxu0 0.0
    %498 = vmatprep.subr.mxu0 0.0
    %499 = vmatpush1.msra.mxu0 0.0
    %500 = vmatprep.subr.mxu0 0.0
    %501 = vmatpush1.msra.mxu0 0.0
    %502 = vmatprep.mubr.f32.mxu0 0.0
    %503 = vmatmul.mubr.f32.gmra.mrb[0].mxu0 %v362
    %v504 = vpop.f32.mrb[0].mxu0
    %v505 = vadd.f32 0.0, %v504
    %v506 = vpop.f32.mrb[0].mxu0
    %v507 = vadd.f32 0.0, %v506
    %508 = vdwg.mxu0
    %509 = vmatprep.subr.mxu0 %v377
    %510 = vmatpush1.msra.mxu0 %v376
    %511 = vmatprep.subr.mxu0 %v381
    %512 = vmatpush1.msra.mxu0 %v380
    %513 = vmatprep.subr.mxu0 %v385
    %514 = vmatpush1.msra.mxu0 %v384
    %515 = vmatprep.subr.mxu0 %v389
    %516 = vmatpush1.msra.mxu0 %v388
    %517 = vmatprep.subr.mxu0 %v393
    %518 = vmatpush1.msra.mxu0 %v392
    %519 = vmatprep.subr.mxu0 %v397
    %520 = vmatpush1.msra.mxu0 %v396
    %521 = vmatprep.subr.mxu0 %v401
    %522 = vmatpush1.msra.mxu0 %v400
    %523 = vmatprep.subr.mxu0 %v405
    %524 = vmatpush1.msra.mxu0 %v404
    %525 = vmatprep.subr.mxu0 %v409
    %526 = vmatpush1.msra.mxu0 %v408
    %527 = vmatprep.subr.mxu0 %v413
    %528 = vmatpush1.msra.mxu0 %v412
    %529 = vmatprep.subr.mxu0 %v417
    %530 = vmatpush1.msra.mxu0 %v416
    %531 = vmatprep.subr.mxu0 %v421
    %532 = vmatpush1.msra.mxu0 %v420
    %533 = vmatprep.subr.mxu0 %v425
    %534 = vmatpush1.msra.mxu0 %v424
    %535 = vmatprep.subr.mxu0 %v429
    %536 = vmatpush1.msra.mxu0 %v428
    %537 = vmatprep.subr.mxu0 %v433
    %538 = vmatpush1.msra.mxu0 %v432
    %539 = vmatprep.subr.mxu0 %v437
    %540 = vmatpush1.msra.mxu0 %v436
    %541 = vmatprep.subr.mxu0 0.0
    %542 = vmatpush1.msra.mxu0 0.0
    %543 = vmatprep.subr.mxu0 0.0
    %544 = vmatpush1.msra.mxu0 0.0
    %545 = vmatprep.subr.mxu0 0.0
    %546 = vmatpush1.msra.mxu0 0.0
    %547 = vmatprep.subr.mxu0 0.0
    %548 = vmatpush1.msra.mxu0 0.0
    %549 = vmatprep.subr.mxu0 0.0
    %550 = vmatpush1.msra.mxu0 0.0
    %551 = vmatprep.subr.mxu0 0.0
    %552 = vmatpush1.msra.mxu0 0.0
    %553 = vmatprep.subr.mxu0 0.0
    %554 = vmatpush1.msra.mxu0 0.0
    %555 = vmatprep.subr.mxu0 0.0
    %556 = vmatpush1.msra.mxu0 0.0
    %557 = vmatprep.subr.mxu0 0.0
    %558 = vmatpush1.msra.mxu0 0.0
    %559 = vmatprep.subr.mxu0 0.0
    %560 = vmatpush1.msra.mxu0 0.0
    %561 = vmatprep.subr.mxu0 0.0
    %562 = vmatpush1.msra.mxu0 0.0
    %563 = vmatprep.subr.mxu0 0.0
    %564 = vmatpush1.msra.mxu0 0.0
    %565 = vmatprep.subr.mxu0 0.0
    %566 = vmatpush1.msra.mxu0 0.0
    %567 = vmatprep.subr.mxu0 0.0
    %568 = vmatpush1.msra.mxu0 0.0
    %569 = vmatprep.subr.mxu0 0.0
    %570 = vmatpush1.msra.mxu0 0.0
    %571 = vmatprep.subr.mxu0 0.0
    %572 = vmatpush1.msra.mxu0 0.0
    %573 = vmatprep.mubr.f32.mxu0 0.0
    %574 = vmatmul.mubr.f32.gmra.mrb[0].mxu0 %v362
    %v575 = vpop.f32.mrb[0].mxu0
    %v576 = vadd.f32 0.0, %v575
    %v577 = vpop.f32.mrb[0].mxu0
    %v578 = vadd.f32 0.0, %v577
    %579 = vdwg.mxu0
    %v580 = vadd.f32 %v370, %v505
    %v581 = vadd.f32 %v371, %v507
    %v582 = vadd.f32 %v372, %v576
    %v583 = vadd.f32 %v373, %v578
    %v584 = vxor.u32 %v580, 2147483648
    %v585 = vmul.f32 %v584, 1.442695
    %v586 = vpow.pop %v585
    %v587 = vadd.f32 %v586, 1.0
    %v588 = vrcp.pop %v587
    %v589 = vmul.f32 1.0, %v588
    %v590 = vxor.u32 %v581, 2147483648
    %v591 = vmul.f32 %v590, 1.442695
    %v592 = vpow.pop %v591
    %v593 = vadd.f32 %v592, 1.0
    %v594 = vrcp.pop %v593
    %v595 = vmul.f32 1.0, %v594
    %v596 = vtanh.pop %v582
    %v597 = vxor.u32 %v583, 2147483648
    %v598 = vmul.f32 %v597, 1.442695
    %v599 = vpow.pop %v598
    %v600 = vadd.f32 %v599, 1.0
    %v601 = vrcp.pop %v600
    %v602 = vmul.f32 1.0, %v601
    %v603 = vmul.f32 %v595, %v363
    %v604 = vmul.f32 %v589, %v596
    %v605 = vadd.f32 %v603, %v604
    %v606 = vtanh.pop %v605
    %v607 = vmul.f32 %v602, %v606
    %v608 = vstv %s357
    %vm609 = vcmp.lt.s32.totalorder %v608, %v355
    %v610 = vsel %vm609, 1, 0
    %611 = vset.pattern.permute.xlu0 0
    %612 = vperm.xlu0 %611, %v610
    %v613 = vpop.permute.xlu0 %612
    %vm614 = vcmp.eq.s32.totalorder %v613, 1
    %v615 = vsel %vm614, %v607, %v362
    %v616 = vsel %vm614, %v605, %v363
  $region34: #{forward.5} parent=0 // loop_footer
    %s361 = sadd.s32 1, %s357
  $region35: #{forward.5} parent=0 // loop_footer_branch
    %356 = sbr.rel target = $region31
  $region36: #{forward.5} parent=0 // loop_exit
    _
  %v617 = vld [vmem:[%s5] sm:$0xff]
  %v618 = vld [vmem:[%s5 + $0x8] sm:$0xff]
  %v619 = vld [vmem:[%s5 + $0x10] sm:$0xff]
  %v620 = vld [vmem:[%s5 + $0x18] sm:$0xff]
  %v621 = vld [vmem:[%s5 + $0x20] sm:$0xff]
  %v622 = vld [vmem:[%s5 + $0x28] sm:$0xff]
  %v623 = vld [vmem:[%s5 + $0x30] sm:$0xff]
  %v624 = vld [vmem:[%s5 + $0x38] sm:$0xff]
  %v625 = vld [vmem:[%s5 + $0x40] sm:$0xff]
  %v626 = vld [vmem:[%s5 + $0x48] sm:$0xff]
  %v627 = vld [vmem:[%s5 + $0x50] sm:$0xff]
  %v628 = vld [vmem:[%s5 + $0x58] sm:$0xff]
  %v629 = vld [vmem:[%s5 + $0x60] sm:$0xff]
  %v630 = vld [vmem:[%s5 + $0x68] sm:$0xff]
  %v631 = vld [vmem:[%s5 + $0x70] sm:$0xff]
  %v632 = vld [vmem:[%s5 + $0x78] sm:$0xff]
  %v633 = vld [vmem:[%s6] sm:$0x1]
  %v635 = vlaneseq
  %v636 = vshrl.u32 %v635, 7
  %v637 = vsub.s32 0, %v636
  %v638 = vrot.slane %v633, %v637
  %640 = vmatprep.subr.mxu0 0.0
  %641 = vmatpush1.msra.mxu0 %v617
  %642 = vmatprep.subr.mxu0 0.0
  %643 = vmatpush1.msra.mxu0 %v618
  %644 = vmatprep.subr.mxu0 0.0
  %645 = vmatpush1.msra.mxu0 %v619
  %646 = vmatprep.subr.mxu0 0.0
  %647 = vmatpush1.msra.mxu0 %v620
  %648 = vmatprep.subr.mxu0 0.0
  %649 = vmatpush1.msra.mxu0 %v621
  %650 = vmatprep.subr.mxu0 0.0
  %651 = vmatpush1.msra.mxu0 %v622
  %652 = vmatprep.subr.mxu0 0.0
  %653 = vmatpush1.msra.mxu0 %v623
  %654 = vmatprep.subr.mxu0 0.0
  %655 = vmatpush1.msra.mxu0 %v624
  %656 = vmatprep.subr.mxu0 0.0
  %657 = vmatpush1.msra.mxu0 %v625
  %658 = vmatprep.subr.mxu0 0.0
  %659 = vmatpush1.msra.mxu0 %v626
  %660 = vmatprep.subr.mxu0 0.0
  %661 = vmatpush1.msra.mxu0 %v627
  %662 = vmatprep.subr.mxu0 0.0
  %663 = vmatpush1.msra.mxu0 %v628
  %664 = vmatprep.subr.mxu0 0.0
  %665 = vmatpush1.msra.mxu0 %v629
  %666 = vmatprep.subr.mxu0 0.0
  %667 = vmatpush1.msra.mxu0 %v630
  %668 = vmatprep.subr.mxu0 0.0
  %669 = vmatpush1.msra.mxu0 %v631
  %670 = vmatprep.subr.mxu0 0.0
  %671 = vmatpush1.msra.mxu0 %v632
  %672 = vmatprep.subr.mxu0 0.0
  %673 = vmatpush1.msra.mxu0 0.0
  %674 = vmatprep.subr.mxu0 0.0
  %675 = vmatpush1.msra.mxu0 0.0
  %676 = vmatprep.subr.mxu0 0.0
  %677 = vmatpush1.msra.mxu0 0.0
  %678 = vmatprep.subr.mxu0 0.0
  %679 = vmatpush1.msra.mxu0 0.0
  %680 = vmatprep.subr.mxu0 0.0
  %681 = vmatpush1.msra.mxu0 0.0
  %682 = vmatprep.subr.mxu0 0.0
  %683 = vmatpush1.msra.mxu0 0.0
  %684 = vmatprep.subr.mxu0 0.0
  %685 = vmatpush1.msra.mxu0 0.0
  %686 = vmatprep.subr.mxu0 0.0
  %687 = vmatpush1.msra.mxu0 0.0
  %688 = vmatprep.subr.mxu0 0.0
  %689 = vmatpush1.msra.mxu0 0.0
  %690 = vmatprep.subr.mxu0 0.0
  %691 = vmatpush1.msra.mxu0 0.0
  %692 = vmatprep.subr.mxu0 0.0
  %693 = vmatpush1.msra.mxu0 0.0
  %694 = vmatprep.subr.mxu0 0.0
  %695 = vmatpush1.msra.mxu0 0.0
  %696 = vmatprep.subr.mxu0 0.0
  %697 = vmatpush1.msra.mxu0 0.0
  %698 = vmatprep.subr.mxu0 0.0
  %699 = vmatpush1.msra.mxu0 0.0
  %700 = vmatprep.subr.mxu0 0.0
  %701 = vmatpush1.msra.mxu0 0.0
  %702 = vmatprep.subr.mxu0 0.0
  %703 = vmatpush1.msra.mxu0 0.0
  %704 = vmatprep.mubr.f32.mxu0 0.0
  %705 = vmatmul.mubr.f32.gmra.mrb[0].mxu0 %v362
  %v706 = vpop.f32.mrb[0].mxu0
  %v707 = vadd.f32 %v638, %v706
  %v708 = vpop.f32.mrb[0].mxu0
  %709 = vdwg.mxu0
  %vm710 = vcmask 23552
  %711 = vst.msk [vmem:[%s7] sm:$0xff] %vm710, %v707
  // Predicated region
  $region37: #{forward.5} parent=0 // pred_check
    _
  $region38: #{forward.5} parent=0 // pred_check_branch
    %713 = sbr.rel (0) target = $region40
  $region39: #{forward.5} parent=0 // pred_region
    _
  $region40: #{forward.5} parent=0 // pred_fallthru
    _
  // Predicated region
  $region41: #{forward.5} parent=0 // pred_check
    _
  $region42: #{forward.5} parent=0 // pred_check_branch
    %715 = sbr.rel (0) target = $region44
  $region43: #{forward.5} parent=0 // pred_region
    _
  $region44: #{forward.5} parent=0 // pred_fallthru
    _

// kernel: forward.3
$region0: #{forward.3}
  #allocation0 [shape = 'u32[]', space=smem, size = 0x4, offset = 0x4, fixed_abs, tag = 'smem constant byte address 0x4 - core index']
  #allocation1 [shape = 'u32[144,128]{1,0:T(1,128)}', space=vmem, size = 0x12000, scoped, tag = 'internal scratch']
  %s0 = inlined_call_operand.vmem [shape: f32[2,8,32], index: 0, kind: input, shape index: {}]
  %s1 = inlined_call_operand.vmem [shape: f32[32,96], index: 1, kind: input, shape index: {}]
  %s2 = inlined_call_operand.vmem [shape: f32[1,96], index: 2, kind: input, shape index: {}]
  %s3 = inlined_call_operand.vmem [shape: f32[32,32], index: 3, kind: input, shape index: {}]
  %s4 = inlined_call_operand.vmem [shape: f32[1,32], index: 4, kind: input, shape index: {}]
  %s5 = inlined_call_operand.vmem [shape: f32[1,32], index: 5, kind: input, shape index: {}]
  %s6 = inlined_call_operand.vmem [shape: f32[1,32], index: 6, kind: input, shape index: {}]
  %s7 = inlined_call_operand.vmem [shape: f32[32,64], index: 7, kind: input, shape index: {}]
  %s8 = inlined_call_operand.vmem [shape: f32[1,64], index: 8, kind: input, shape index: {}]
  %s9 = inlined_call_operand.vmem [shape: f32[64,32], index: 9, kind: input, shape index: {}]
  %s10 = inlined_call_operand.vmem [shape: f32[1,32], index: 10, kind: input, shape index: {}]
  %s11 = inlined_call_operand.vmem [shape: f32[1,32], index: 11, kind: input, shape index: {}]
  %s12 = inlined_call_operand.vmem [shape: f32[1,32], index: 12, kind: input, shape index: {}]
  %s13 = inlined_call_operand.vmem [shape: f32[2,8,32], index: 13, kind: output, shape index: {}]
  %s14 = sld [smem:[#allocation0]]
  $region85: #{forward.3} parent=0
    _
  %s16 = ssub.s32 1, %s14
  %s17 = scalar_select 0, %s16, %s14
  loop: start=0, step=1, limit=4
  $region2: #{forward.3} parent=0 // loop_pre_header
    _
  $region3: #{forward.3} parent=0 // loop_header
    %s19 = sphi 0, %s23
    %p20 = scmp.ge.s32.totalorder %s19, 4
    %s29 = sphi 0, %s31
    %s32 = sphi 0, %s29
    %s33 = sphi 0, %s32
    %s49 = sphi 0, %s33
    %s53 = sphi 0, %s53
    %s55 = sphi 0, %s53
    %s56 = sphi 0, %s55
    %s70 = sphi 0, %s56
    %s74 = sphi 0, %s74
    %s76 = sphi 0, %s74
    %s77 = sphi 0, %s76
    %s91 = sphi 0, %s77
    %s95 = sphi 0, %s95
    %s97 = sphi 0, %s95
    %s98 = sphi 0, %s97
    %s112 = sphi 0, %s98
    %s116 = sphi 0, %s116
    %s118 = sphi 0, %s116
    %s119 = sphi 0, %s118
    %s133 = sphi 0, %s119
    %s137 = sphi 0, %s137
    %s139 = sphi 0, %s137
    %s140 = sphi 0, %s139
    %s154 = sphi 0, %s140
    %s158 = sphi 0, %s158
    %s160 = sphi 0, %s158
    %s161 = sphi 0, %s160
    %s175 = sphi 0, %s161
    %s179 = sphi 0, %s179
    %s181 = sphi 0, %s179
    %s182 = sphi 0, %s181
    %s196 = sphi 0, %s182
    %s200 = sphi 0, %s200
    %s202 = sphi 0, %s200
    %s203 = sphi 0, %s202
    %s217 = sphi 0, %s203
    %s221 = sphi 0, %s221
    %s223 = sphi 0, %s221
    %s224 = sphi 0, %s223
    %s238 = sphi 0, %s224
    %s242 = sphi 0, %s242
    %s244 = sphi 0, %s242
    %s245 = sphi 0, %s244
    %s259 = sphi 0, %s245
    %s263 = sphi 0, %s263
    %s265 = sphi 0, %s263
    %s266 = sphi 0, %s265
    %s280 = sphi 0, %s266
    %s284 = sphi 0, %s284
    %s286 = sphi 0, %s284
    %s287 = sphi 0, %s286
    %s301 = sphi 0, %s287
    %s307 = sphi 0, %s309
    %s310 = sphi 0, %s307
    %s311 = sphi 0, %s310
    %s327 = sphi 0, %s311
  $region4: #{forward.3} parent=0 // loop_header_branch
    %22 = sbr.rel (%p20) target = $region8
  $region5: #{forward.3} parent=0 // loop_body
    %s24 = ssub.s32 %s19, 1
    %s25 = ssub.s32 %s19, 2
    %s26 = sadd.s32 %s19, 1
    %s27 = ssub.s32 %s19, %s26
    %p28 = scmp.eq.s32.totalorder %s27, 0
    %s30 = sadd.s32 %s29, 1
    %s31 = scalar_select %p28, %s29, %s30
    %p34 = pneg %p28
    %p35 = scmp.eq.s32.totalorder %s19, 1
    %p36 = por %p34, %p35
    %p37 = scmp.ne.s32.totalorder %s29, %s32
    %p38 = scmp.eq.s32.totalorder %s19, 0
    %p39 = por %p37, %p38
    %p40 = scmp.ne.s32.totalorder %s29, %s32
    %p41 = scmp.eq.s32.totalorder %s24, 1
    %p42 = por %p40, %p41
    %p43 = scmp.ne.s32.totalorder %s32, %s33
    %p44 = scmp.eq.s32.totalorder %s24, 0
    %p45 = por %p43, %p44
    %p46 = scmp.ne.s32.totalorder %s32, %s33
    %p47 = scmp.eq.s32.totalorder %s25, 1
    %p48 = por %p46, %p47
    %p50 = scmp.ne.s32.totalorder %s33, %s49
    %p51 = scmp.eq.s32.totalorder %s25, 0
    %p52 = por %p50, %p51
    %s54 = sadd.s32 %s53, 1
    %p57 = scmp.eq.s32.totalorder %s19, 1
    %p58 = scmp.ne.s32.totalorder %s53, %s55
    %p59 = scmp.eq.s32.totalorder %s19, 0
    %p60 = por %p58, %p59
    %p61 = scmp.ne.s32.totalorder %s53, %s55
    %p62 = scmp.eq.s32.totalorder %s24, 1
    %p63 = por %p61, %p62
    %p64 = scmp.ne.s32.totalorder %s55, %s56
    %p65 = scmp.eq.s32.totalorder %s24, 0
    %p66 = por %p64, %p65
    %p67 = scmp.ne.s32.totalorder %s55, %s56
    %p68 = scmp.eq.s32.totalorder %s25, 1
    %p69 = por %p67, %p68
    %p71 = scmp.ne.s32.totalorder %s56, %s70
    %p72 = scmp.eq.s32.totalorder %s25, 0
    %p73 = por %p71, %p72
    %s75 = sadd.s32 %s74, 1
    %p78 = scmp.eq.s32.totalorder %s19, 1
    %p79 = scmp.ne.s32.totalorder %s74, %s76
    %p80 = scmp.eq.s32.totalorder %s19, 0
    %p81 = por %p79, %p80
    %p82 = scmp.ne.s32.totalorder %s74, %s76
    %p83 = scmp.eq.s32.totalorder %s24, 1
    %p84 = por %p82, %p83
    %p85 = scmp.ne.s32.totalorder %s76, %s77
    %p86 = scmp.eq.s32.totalorder %s24, 0
    %p87 = por %p85, %p86
    %p88 = scmp.ne.s32.totalorder %s76, %s77
    %p89 = scmp.eq.s32.totalorder %s25, 1
    %p90 = por %p88, %p89
    %p92 = scmp.ne.s32.totalorder %s77, %s91
    %p93 = scmp.eq.s32.totalorder %s25, 0
    %p94 = por %p92, %p93
    %s96 = sadd.s32 %s95, 1
    %p99 = scmp.eq.s32.totalorder %s19, 1
    %p100 = scmp.ne.s32.totalorder %s95, %s97
    %p101 = scmp.eq.s32.totalorder %s19, 0
    %p102 = por %p100, %p101
    %p103 = scmp.ne.s32.totalorder %s95, %s97
    %p104 = scmp.eq.s32.totalorder %s24, 1
    %p105 = por %p103, %p104
    %p106 = scmp.ne.s32.totalorder %s97, %s98
    %p107 = scmp.eq.s32.totalorder %s24, 0
    %p108 = por %p106, %p107
    %p109 = scmp.ne.s32.totalorder %s97, %s98
    %p110 = scmp.eq.s32.totalorder %s25, 1
    %p111 = por %p109, %p110
    %p113 = scmp.ne.s32.totalorder %s98, %s112
    %p114 = scmp.eq.s32.totalorder %s25, 0
    %p115 = por %p113, %p114
    %s117 = sadd.s32 %s116, 1
    %p120 = scmp.eq.s32.totalorder %s19, 1
    %p121 = scmp.ne.s32.totalorder %s116, %s118
    %p122 = scmp.eq.s32.totalorder %s19, 0
    %p123 = por %p121, %p122
    %p124 = scmp.ne.s32.totalorder %s116, %s118
    %p125 = scmp.eq.s32.totalorder %s24, 1
    %p126 = por %p124, %p125
    %p127 = scmp.ne.s32.totalorder %s118, %s119
    %p128 = scmp.eq.s32.totalorder %s24, 0
    %p129 = por %p127, %p128
    %p130 = scmp.ne.s32.totalorder %s118, %s119
    %p131 = scmp.eq.s32.totalorder %s25, 1
    %p132 = por %p130, %p131
    %p134 = scmp.ne.s32.totalorder %s119, %s133
    %p135 = scmp.eq.s32.totalorder %s25, 0
    %p136 = por %p134, %p135
    %s138 = sadd.s32 %s137, 1
    %p141 = scmp.eq.s32.totalorder %s19, 1
    %p142 = scmp.ne.s32.totalorder %s137, %s139
    %p143 = scmp.eq.s32.totalorder %s19, 0
    %p144 = por %p142, %p143
    %p145 = scmp.ne.s32.totalorder %s137, %s139
    %p146 = scmp.eq.s32.totalorder %s24, 1
    %p147 = por %p145, %p146
    %p148 = scmp.ne.s32.totalorder %s139, %s140
    %p149 = scmp.eq.s32.totalorder %s24, 0
    %p150 = por %p148, %p149
    %p151 = scmp.ne.s32.totalorder %s139, %s140
    %p152 = scmp.eq.s32.totalorder %s25, 1
    %p153 = por %p151, %p152
    %p155 = scmp.ne.s32.totalorder %s140, %s154
    %p156 = scmp.eq.s32.totalorder %s25, 0
    %p157 = por %p155, %p156
    %s159 = sadd.s32 %s158, 1
    %p162 = scmp.eq.s32.totalorder %s19, 1
    %p163 = scmp.ne.s32.totalorder %s158, %s160
    %p164 = scmp.eq.s32.totalorder %s19, 0
    %p165 = por %p163, %p164
    %p166 = scmp.ne.s32.totalorder %s158, %s160
    %p167 = scmp.eq.s32.totalorder %s24, 1
    %p168 = por %p166, %p167
    %p169 = scmp.ne.s32.totalorder %s160, %s161
    %p170 = scmp.eq.s32.totalorder %s24, 0
    %p171 = por %p169, %p170
    %p172 = scmp.ne.s32.totalorder %s160, %s161
    %p173 = scmp.eq.s32.totalorder %s25, 1
    %p174 = por %p172, %p173
    %p176 = scmp.ne.s32.totalorder %s161, %s175
    %p177 = scmp.eq.s32.totalorder %s25, 0
    %p178 = por %p176, %p177
    %s180 = sadd.s32 %s179, 1
    %p183 = scmp.eq.s32.totalorder %s19, 1
    %p184 = scmp.ne.s32.totalorder %s179, %s181
    %p185 = scmp.eq.s32.totalorder %s19, 0
    %p186 = por %p184, %p185
    %p187 = scmp.ne.s32.totalorder %s179, %s181
    %p188 = scmp.eq.s32.totalorder %s24, 1
    %p189 = por %p187, %p188
    %p190 = scmp.ne.s32.totalorder %s181, %s182
    %p191 = scmp.eq.s32.totalorder %s24, 0
    %p192 = por %p190, %p191
    %p193 = scmp.ne.s32.totalorder %s181, %s182
    %p194 = scmp.eq.s32.totalorder %s25, 1
    %p195 = por %p193, %p194
    %p197 = scmp.ne.s32.totalorder %s182, %s196
    %p198 = scmp.eq.s32.totalorder %s25, 0
    %p199 = por %p197, %p198
    %s201 = sadd.s32 %s200, 1
    %p204 = scmp.eq.s32.totalorder %s19, 1
    %p205 = scmp.ne.s32.totalorder %s200, %s202
    %p206 = scmp.eq.s32.totalorder %s19, 0
    %p207 = por %p205, %p206
    %p208 = scmp.ne.s32.totalorder %s200, %s202
    %p209 = scmp.eq.s32.totalorder %s24, 1
    %p210 = por %p208, %p209
    %p211 = scmp.ne.s32.totalorder %s202, %s203
    %p212 = scmp.eq.s32.totalorder %s24, 0
    %p213 = por %p211, %p212
    %p214 = scmp.ne.s32.totalorder %s202, %s203
    %p215 = scmp.eq.s32.totalorder %s25, 1
    %p216 = por %p214, %p215
    %p218 = scmp.ne.s32.totalorder %s203, %s217
    %p219 = scmp.eq.s32.totalorder %s25, 0
    %p220 = por %p218, %p219
    %s222 = sadd.s32 %s221, 1
    %p225 = scmp.eq.s32.totalorder %s19, 1
    %p226 = scmp.ne.s32.totalorder %s221, %s223
    %p227 = scmp.eq.s32.totalorder %s19, 0
    %p228 = por %p226, %p227
    %p229 = scmp.ne.s32.totalorder %s221, %s223
    %p230 = scmp.eq.s32.totalorder %s24, 1
    %p231 = por %p229, %p230
    %p232 = scmp.ne.s32.totalorder %s223, %s224
    %p233 = scmp.eq.s32.totalorder %s24, 0
    %p234 = por %p232, %p233
    %p235 = scmp.ne.s32.totalorder %s223, %s224
    %p236 = scmp.eq.s32.totalorder %s25, 1
    %p237 = por %p235, %p236
    %p239 = scmp.ne.s32.totalorder %s224, %s238
    %p240 = scmp.eq.s32.totalorder %s25, 0
    %p241 = por %p239, %p240
    %s243 = sadd.s32 %s242, 1
    %p246 = scmp.eq.s32.totalorder %s19, 1
    %p247 = scmp.ne.s32.totalorder %s242, %s244
    %p248 = scmp.eq.s32.totalorder %s19, 0
    %p249 = por %p247, %p248
    %p250 = scmp.ne.s32.totalorder %s242, %s244
    %p251 = scmp.eq.s32.totalorder %s24, 1
    %p252 = por %p250, %p251
    %p253 = scmp.ne.s32.totalorder %s244, %s245
    %p254 = scmp.eq.s32.totalorder %s24, 0
    %p255 = por %p253, %p254
    %p256 = scmp.ne.s32.totalorder %s244, %s245
    %p257 = scmp.eq.s32.totalorder %s25, 1
    %p258 = por %p256, %p257
    %p260 = scmp.ne.s32.totalorder %s245, %s259
    %p261 = scmp.eq.s32.totalorder %s25, 0
    %p262 = por %p260, %p261
    %s264 = sadd.s32 %s263, 1
    %p267 = scmp.eq.s32.totalorder %s19, 1
    %p268 = scmp.ne.s32.totalorder %s263, %s265
    %p269 = scmp.eq.s32.totalorder %s19, 0
    %p270 = por %p268, %p269
    %p271 = scmp.ne.s32.totalorder %s263, %s265
    %p272 = scmp.eq.s32.totalorder %s24, 1
    %p273 = por %p271, %p272
    %p274 = scmp.ne.s32.totalorder %s265, %s266
    %p275 = scmp.eq.s32.totalorder %s24, 0
    %p276 = por %p274, %p275
    %p277 = scmp.ne.s32.totalorder %s265, %s266
    %p278 = scmp.eq.s32.totalorder %s25, 1
    %p279 = por %p277, %p278
    %p281 = scmp.ne.s32.totalorder %s266, %s280
    %p282 = scmp.eq.s32.totalorder %s25, 0
    %p283 = por %p281, %p282
    %s285 = sadd.s32 %s284, 1
    %p288 = scmp.eq.s32.totalorder %s19, 1
    %p289 = scmp.ne.s32.totalorder %s284, %s286
    %p290 = scmp.eq.s32.totalorder %s19, 0
    %p291 = por %p289, %p290
    %p292 = scmp.ne.s32.totalorder %s284, %s286
    %p293 = scmp.eq.s32.totalorder %s24, 1
    %p294 = por %p292, %p293
    %p295 = scmp.ne.s32.totalorder %s286, %s287
    %p296 = scmp.eq.s32.totalorder %s24, 0
    %p297 = por %p295, %p296
    %p298 = scmp.ne.s32.totalorder %s286, %s287
    %p299 = scmp.eq.s32.totalorder %s25, 1
    %p300 = por %p298, %p299
    %p302 = scmp.ne.s32.totalorder %s287, %s301
    %p303 = scmp.eq.s32.totalorder %s25, 0
    %p304 = por %p302, %p303
    %s305 = ssub.s32 %s19, %s26
    %p306 = scmp.eq.s32.totalorder %s305, 0
    %s308 = sadd.s32 %s307, 1
    %s309 = scalar_select %p306, %s307, %s308
    %p312 = pneg %p306
    %p313 = scmp.eq.s32.totalorder %s19, 1
    %p314 = por %p312, %p313
    %p315 = scmp.ne.s32.totalorder %s307, %s310
    %p316 = scmp.eq.s32.totalorder %s19, 0
    %p317 = por %p315, %p316
    %p318 = scmp.ne.s32.totalorder %s307, %s310
    %p319 = scmp.eq.s32.totalorder %s24, 1
    %p320 = por %p318, %p319
    %p321 = scmp.ne.s32.totalorder %s310, %s311
    %p322 = scmp.eq.s32.totalorder %s24, 0
    %p323 = por %p321, %p322
    %p324 = scmp.ne.s32.totalorder %s310, %s311
    %p325 = scmp.eq.s32.totalorder %s25, 1
    %p326 = por %p324, %p325
    %p328 = scmp.ne.s32.totalorder %s311, %s327
    %p329 = scmp.eq.s32.totalorder %s25, 0
    %p330 = por %p328, %p329
    %p331 = scmp.le.s32.totalorder 1, %s19
    %p332 = scmp.lt.s32.totalorder %s19, 3
    %p333 = pnand %p331, %p332
    %p334 = pneg %p333
    // Predicated region
    $region9: #{forward.3} parent=5 // pred_check
      _
    $region10: #{forward.3} parent=5 // pred_check_branch
      %336 = sbr.rel (%p333) target = $region12
    $region11: #{forward.3} parent=5 // pred_region
      %s337 = ssub.s32 %s19, 1
      // Predicated region
      $region13: #{forward.3} parent=11 // pred_check
        %p338 = pneg %p66
      $region14: #{forward.3} parent=11 // pred_check_branch
        %340 = sbr.rel (%p338) target = $region16
      $region15: #{forward.3} parent=11 // pred_region
        _
      $region16: #{forward.3} parent=11 // pred_fallthru
        _
      // Predicated region
      $region17: #{forward.3} parent=11 // pred_check
        %p341 = pneg %p87
      $region18: #{forward.3} parent=11 // pred_check_branch
        %343 = sbr.rel (%p341) target = $region20
      $region19: #{forward.3} parent=11 // pred_region
        _
      $region20: #{forward.3} parent=11 // pred_fallthru
        _
      // Predicated region
      $region21: #{forward.3} parent=11 // pred_check
        %p344 = pneg %p108
      $region22: #{forward.3} parent=11 // pred_check_branch
        %346 = sbr.rel (%p344) target = $region24
      $region23: #{forward.3} parent=11 // pred_region
        _
      $region24: #{forward.3} parent=11 // pred_fallthru
        _
      // Predicated region
      $region25: #{forward.3} parent=11 // pred_check
        %p347 = pneg %p129
      $region26: #{forward.3} parent=11 // pred_check_branch
        %349 = sbr.rel (%p347) target = $region28
      $region27: #{forward.3} parent=11 // pred_region
        _
      $region28: #{forward.3} parent=11 // pred_fallthru
        _
      // Predicated region
      $region29: #{forward.3} parent=11 // pred_check
        %p350 = pneg %p150
      $region30: #{forward.3} parent=11 // pred_check_branch
        %352 = sbr.rel (%p350) target = $region32
      $region31: #{forward.3} parent=11 // pred_region
        _
      $region32: #{forward.3} parent=11 // pred_fallthru
        _
      // Predicated region
      $region33: #{forward.3} parent=11 // pred_check
        %p353 = pneg %p171
      $region34: #{forward.3} parent=11 // pred_check_branch
        %355 = sbr.rel (%p353) target = $region36
      $region35: #{forward.3} parent=11 // pred_region
        _
      $region36: #{forward.3} parent=11 // pred_fallthru
        _
      // Predicated region
      $region37: #{forward.3} parent=11 // pred_check
        %p356 = pneg %p192
      $region38: #{forward.3} parent=11 // pred_check_branch
        %358 = sbr.rel (%p356) target = $region40
      $region39: #{forward.3} parent=11 // pred_region
        _
      $region40: #{forward.3} parent=11 // pred_fallthru
        _
      // Predicated region
      $region41: #{forward.3} parent=11 // pred_check
        %p359 = pneg %p213
      $region42: #{forward.3} parent=11 // pred_check_branch
        %361 = sbr.rel (%p359) target = $region44
      $region43: #{forward.3} parent=11 // pred_region
        _
      $region44: #{forward.3} parent=11 // pred_fallthru
        _
      // Predicated region
      $region45: #{forward.3} parent=11 // pred_check
        %p362 = pneg %p234
      $region46: #{forward.3} parent=11 // pred_check_branch
        %364 = sbr.rel (%p362) target = $region48
      $region47: #{forward.3} parent=11 // pred_region
        _
      $region48: #{forward.3} parent=11 // pred_fallthru
        _
      // Predicated region
      $region49: #{forward.3} parent=11 // pred_check
        %p365 = pneg %p255
      $region50: #{forward.3} parent=11 // pred_check_branch
        %367 = sbr.rel (%p365) target = $region52
      $region51: #{forward.3} parent=11 // pred_region
        _
      $region52: #{forward.3} parent=11 // pred_fallthru
        _
      // Predicated region
      $region53: #{forward.3} parent=11 // pred_check
        %p368 = pneg %p276
      $region54: #{forward.3} parent=11 // pred_check_branch
        %370 = sbr.rel (%p368) target = $region56
      $region55: #{forward.3} parent=11 // pred_region
        _
      $region56: #{forward.3} parent=11 // pred_fallthru
        _
      // Predicated region
      $region57: #{forward.3} parent=11 // pred_check
        %p371 = pneg %p297
      $region58: #{forward.3} parent=11 // pred_check_branch
        %373 = sbr.rel (%p371) target = $region60
      $region59: #{forward.3} parent=11 // pred_region
        _
      $region60: #{forward.3} parent=11 // pred_fallthru
        _
    $region12: #{forward.3} parent=5 // pred_fallthru
      _
    %p374 = scmp.lt.s32.totalorder %s19, 2
    // Predicated region
    $region61: #{forward.3} parent=5 // pred_check
      %p375 = pneg %p374
    $region62: #{forward.3} parent=5 // pred_check_branch
      %377 = sbr.rel (%p375) target = $region64
    $region63: #{forward.3} parent=5 // pred_region
      // Predicated region
      $region65: #{forward.3} parent=63 // pred_check
        %p378 = pneg %p39
      $region66: #{forward.3} parent=63 // pred_check_branch
        %380 = sbr.rel (%p378) target = $region68
      $region67: #{forward.3} parent=63 // pred_region
        %p381 = scmp.lt.s32.totalorder %s19, 1
        %s382 = scalar_select %p381, %s19, 1
        %s383 = smul.addr %s382, 8
        %s384 = scalar_lea.vmem %s0, %s383
      $region68: #{forward.3} parent=63 // pred_fallthru
        _
    $region64: #{forward.3} parent=5 // pred_fallthru
      _
    %p385 = scmp.le.s32.totalorder 1, %s19
    %p386 = scmp.lt.s32.totalorder %s19, 3
    %p387 = pnand %p385, %p386
    %p388 = pneg %p387
    // Predicated region
    $region69: #{forward.3} parent=5 // pred_check
      _
    $region70: #{forward.3} parent=5 // pred_check_branch
      %390 = sbr.rel (%p387) target = $region72
    $region71: #{forward.3} parent=5 // pred_region
      %s391 = ssub.s32 %s19, 1
      %p392 = scmp.lt.s32.totalorder %s24, 1
      %s393 = scalar_select %p392, %s24, 1
      %s394 = smul.addr %s393, 8
      %s395 = scalar_lea.vmem %s0, %s394
      %p396 = pneg %p45
      %p397 = pneg %p42
      %p398 = pneg %p66
      %p399 = pneg %p63
      %p400 = pneg %p87
      %p401 = pneg %p84
      %p402 = pneg %p108
      %p403 = pneg %p105
      %p404 = pneg %p129
      %p405 = pneg %p126
      %p406 = pneg %p150
      %p407 = pneg %p147
      %p408 = pneg %p171
      %p409 = pneg %p168
      %p410 = pneg %p192
      %p411 = pneg %p189
      %p412 = pneg %p213
      %p413 = pneg %p210
      %p414 = pneg %p234
      %p415 = pneg %p231
      %p416 = pneg %p255
      %p417 = pneg %p252
      %p418 = pneg %p276
      %p419 = pneg %p273
      %p420 = pneg %p297
      %p421 = pneg %p294
      %p422 = pneg %p323
      %p423 = pneg %p320
      %p424 = scmp.lt.s32.totalorder %s24, 1
      %s425 = scalar_select %p424, %s24, 1
      %s426 = smul.addr %s425, 8
      %s427 = scalar_lea.vmem %s13, %s426
      %p428 = scmp.lt.s32.totalorder %s24, 1
      %s429 = scalar_select %p428, %s24, 1
      %s430 = smul.addr %s429, 8
      %s431 = scalar_lea.vmem %s0, %s430
      %p432 = scmp.lt.s32.totalorder %s24, 1
      %s433 = scalar_select %p432, %s24, 1
      %s434 = smul.addr %s433, 8
      %s435 = scalar_lea.vmem %s13, %s434
      %v436 = vld [vmem:[%s431] sm:$0xff]
      %v437 = vld [vmem:[%s1] sm:$0xff]
      %v438 = vld [vmem:[%s1 + $0x8] sm:$0xff]
      %v439 = vld [vmem:[%s1 + $0x10] sm:$0xff]
      %v440 = vld [vmem:[%s1 + $0x18] sm:$0xff]
      %v441 = vld [vmem:[%s2] sm:$0x1]
      %v443 = vlaneseq
      %v444 = vshrl.u32 %v443, 7
      %v445 = vsub.s32 0, %v444
      %v446 = vrot.slane %v441, %v445
      %vm448 = vcmask 261120
      %v450 = vsel %vm448, %v436, 0
      %452 = vmatprep.subr.mxu0 0.0
      %453 = vmatpush1.msra.mxu0 %v437
      %454 = vmatprep.subr.mxu0 0.0
      %455 = vmatpush1.msra.mxu0 %v438
      %456 = vmatprep.subr.mxu0 0.0
      %457 = vmatpush1.msra.mxu0 %v439
      %458 = vmatprep.subr.mxu0 0.0
      %459 = vmatpush1.msra.mxu0 %v440
      %460 = vmatprep.subr.mxu0 0.0
      %461 = vmatpush1.msra.mxu0 0.0
      %462 = vmatprep.subr.mxu0 0.0
      %463 = vmatpush1.msra.mxu0 0.0
      %464 = vmatprep.subr.mxu0 0.0
      %465 = vmatpush1.msra.mxu0 0.0
      %466 = vmatprep.subr.mxu0 0.0
      %467 = vmatpush1.msra.mxu0 0.0
      %468 = vmatprep.subr.mxu0 0.0
      %469 = vmatpush1.msra.mxu0 0.0
      %470 = vmatprep.subr.mxu0 0.0
      %471 = vmatpush1.msra.mxu0 0.0
      %472 = vmatprep.subr.mxu0 0.0
      %473 = vmatpush1.msra.mxu0 0.0
      %474 = vmatprep.subr.mxu0 0.0
      %475 = vmatpush1.msra.mxu0 0.0
      %476 = vmatprep.subr.mxu0 0.0
      %477 = vmatpush1.msra.mxu0 0.0
      %478 = vmatprep.subr.mxu0 0.0
      %479 = vmatpush1.msra.mxu0 0.0
      %480 = vmatprep.subr.mxu0 0.0
      %481 = vmatpush1.msra.mxu0 0.0
      %482 = vmatprep.subr.mxu0 0.0
      %483 = vmatpush1.msra.mxu0 0.0
      %484 = vmatprep.subr.mxu0 0.0
      %485 = vmatpush1.msra.mxu0 0.0
      %486 = vmatprep.subr.mxu0 0.0
      %487 = vmatpush1.msra.mxu0 0.0
      %488 = vmatprep.subr.mxu0 0.0
      %489 = vmatpush1.msra.mxu0 0.0
      %490 = vmatprep.subr.mxu0 0.0
      %491 = vmatpush1.msra.mxu0 0.0
      %492 = vmatprep.subr.mxu0 0.0
      %493 = vmatpush1.msra.mxu0 0.0
      %494 = vmatprep.subr.mxu0 0.0
      %495 = vmatpush1.msra.mxu0 0.0
      %496 = vmatprep.subr.mxu0 0.0
      %497 = vmatpush1.msra.mxu0 0.0
      %498 = vmatprep.subr.mxu0 0.0
      %499 = vmatpush1.msra.mxu0 0.0
      %500 = vmatprep.subr.mxu0 0.0
      %501 = vmatpush1.msra.mxu0 0.0
      %502 = vmatprep.subr.mxu0 0.0
      %503 = vmatpush1.msra.mxu0 0.0
      %504 = vmatprep.subr.mxu0 0.0
      %505 = vmatpush1.msra.mxu0 0.0
      %506 = vmatprep.subr.mxu0 0.0
      %507 = vmatpush1.msra.mxu0 0.0
      %508 = vmatprep.subr.mxu0 0.0
      %509 = vmatpush1.msra.mxu0 0.0
      %510 = vmatprep.subr.mxu0 0.0
      %511 = vmatpush1.msra.mxu0 0.0
      %512 = vmatprep.subr.mxu0 0.0
      %513 = vmatpush1.msra.mxu0 0.0
      %514 = vmatprep.subr.mxu0 0.0
      %515 = vmatpush1.msra.mxu0 0.0
      %516 = vmatprep.mubr.f32.mxu0 0.0
      %517 = vmatmul.mubr.f32.gmra.mrb[0].mxu0 %v450
      %v518 = vpop.f32.mrb[0].mxu0
      %v519 = vadd.f32 %v446, %v518
      %v520 = vpop.f32.mrb[0].mxu0
      %521 = vdwg.mxu0
      %523 = vrot.lane.b32.xlu0 %v519, 96
      %v524 = vpop.permute.xlu0 %523
      %vm525 = vcmask 64512
      %v526 = vsel %vm525, %v519, 0
      %v528 = vsel %vm525, %v524, 0
      %530 = vmatprep.subr.mxu0 0.0
      %531 = vmatpush1.xpose.msra.mxu0 %v528
      %532 = vmatprep.subr.mxu0 0.0
      %533 = vmatpush1.xpose.msra.mxu0 0.0
      %534 = vmatprep.subr.mxu0 0.0
      %535 = vmatpush1.xpose.msra.mxu0 0.0
      %536 = vmatprep.subr.mxu0 0.0
      %537 = vmatpush1.xpose.msra.mxu0 0.0
      %538 = vmatprep.subr.mxu0 0.0
      %539 = vmatpush1.xpose.msra.mxu0 0.0
      %540 = vmatprep.subr.mxu0 0.0
      %541 = vmatpush1.xpose.msra.mxu0 0.0
      %542 = vmatprep.subr.mxu0 0.0
      %543 = vmatpush1.xpose.msra.mxu0 0.0
      %544 = vmatprep.subr.mxu0 0.0
      %545 = vmatpush1.xpose.msra.mxu0 0.0
      %546 = vmatprep.subr.mxu0 0.0
      %547 = vmatpush1.xpose.msra.mxu0 0.0
      %548 = vmatprep.subr.mxu0 0.0
      %549 = vmatpush1.xpose.msra.mxu0 0.0
      %550 = vmatprep.subr.mxu0 0.0
      %551 = vmatpush1.xpose.msra.mxu0 0.0
      %552 = vmatprep.subr.mxu0 0.0
      %553 = vmatpush1.xpose.msra.mxu0 0.0
      %554 = vmatprep.subr.mxu0 0.0
      %555 = vmatpush1.xpose.msra.mxu0 0.0
      %556 = vmatprep.subr.mxu0 0.0
      %557 = vmatpush1.xpose.msra.mxu0 0.0
      %558 = vmatprep.subr.mxu0 0.0
      %559 = vmatpush1.xpose.msra.mxu0 0.0
      %560 = vmatprep.subr.mxu0 0.0
      %561 = vmatpush1.xpose.msra.mxu0 0.0
      %562 = vmatprep.subr.mxu0 0.0
      %563 = vmatpush1.xpose.msra.mxu0 0.0
      %564 = vmatprep.subr.mxu0 0.0
      %565 = vmatpush1.xpose.msra.mxu0 0.0
      %566 = vmatprep.subr.mxu0 0.0
      %567 = vmatpush1.xpose.msra.mxu0 0.0
      %568 = vmatprep.subr.mxu0 0.0
      %569 = vmatpush1.xpose.msra.mxu0 0.0
      %570 = vmatprep.subr.mxu0 0.0
      %571 = vmatpush1.xpose.msra.mxu0 0.0
      %572 = vmatprep.subr.mxu0 0.0
      %573 = vmatpush1.xpose.msra.mxu0 0.0
      %574 = vmatprep.subr.mxu0 0.0
      %575 = vmatpush1.xpose.msra.mxu0 0.0
      %576 = vmatprep.subr.mxu0 0.0
      %577 = vmatpush1.xpose.msra.mxu0 0.0
      %578 = vmatprep.subr.mxu0 0.0
      %579 = vmatpush1.xpose.msra.mxu0 0.0
      %580 = vmatprep.subr.mxu0 0.0
      %581 = vmatpush1.xpose.msra.mxu0 0.0
      %582 = vmatprep.subr.mxu0 0.0
      %583 = vmatpush1.xpose.msra.mxu0 0.0
      %584 = vmatprep.subr.mxu0 0.0
      %585 = vmatpush1.xpose.msra.mxu0 0.0
      %586 = vmatprep.subr.mxu0 0.0
      %587 = vmatpush1.xpose.msra.mxu0 0.0
      %588 = vmatprep.subr.mxu0 0.0
      %589 = vmatpush1.xpose.msra.mxu0 0.0
      %590 = vmatprep.subr.mxu0 0.0
      %591 = vmatpush1.xpose.msra.mxu0 0.0
      %592 = vmatprep.subr.mxu0 0.0
      %593 = vmatpush1.xpose.msra.mxu0 0.0
      %594 = vmatprep.mubr.f32.mxu0 0.0
      %595 = vmatmul.mubr.f32.gmra.mrb[0].mxu0 %v526
      %v596 = vpop.f32.mrb[0].mxu0
      %v597 = vadd.f32 0.0, %v596
      %v598 = vpop.f32.mrb[0].mxu0
      %599 = vdwg.mxu0
      %v600 = vmul.f32 %v597, 0.35355338
      %v601 = vsel %vm525, %v600, -inf
      %602 = vmax.xlane.f32.xlu0 %v601
      %v603 = vpop.xlane.xlu0 %602
      %v604 = vsub.f32 %v600, %v603
      %v605 = vmul.f32 %v604, 1.442695
      %v606 = vpow.pop %v605
      %v607 = vsel %vm525, %v606, 0.0
      %608 = vadd.xlane.f32.xlu0 %v607
      %v609 = vpop.xlane.xlu0 %608
      %v610 = vrcp.pop %v609
      %v611 = vmul.f32 %v606, %v610
      %612 = vrot.lane.b32.xlu0 %v519, 64
      %v613 = vpop.permute.xlu0 %612
      %v616 = vsel %vm525, %v611, 0
      %618 = vmatprep.subr.mxu0 0.0
      %619 = vmatpush1.msra.mxu0 %v613
      %620 = vmatprep.subr.mxu0 0.0
      %621 = vmatpush1.msra.mxu0 0.0
      %622 = vmatprep.subr.mxu0 0.0
      %623 = vmatpush1.msra.mxu0 0.0
      %624 = vmatprep.subr.mxu0 0.0
      %625 = vmatpush1.msra.mxu0 0.0
      %626 = vmatprep.subr.mxu0 0.0
      %627 = vmatpush1.msra.mxu0 0.0
      %628 = vmatprep.subr.mxu0 0.0
      %629 = vmatpush1.msra.mxu0 0.0
      %630 = vmatprep.subr.mxu0 0.0
      %631 = vmatpush1.msra.mxu0 0.0
      %632 = vmatprep.subr.mxu0 0.0
      %633 = vmatpush1.msra.mxu0 0.0
      %634 = vmatprep.subr.mxu0 0.0
      %635 = vmatpush1.msra.mxu0 0.0
      %636 = vmatprep.subr.mxu0 0.0
      %637 = vmatpush1.msra.mxu0 0.0
      %638 = vmatprep.subr.mxu0 0.0
      %639 = vmatpush1.msra.mxu0 0.0
      %640 = vmatprep.subr.mxu0 0.0
      %641 = vmatpush1.msra.mxu0 0.0
      %642 = vmatprep.subr.mxu0 0.0
      %643 = vmatpush1.msra.mxu0 0.0
      %644 = vmatprep.subr.mxu0 0.0
      %645 = vmatpush1.msra.mxu0 0.0
      %646 = vmatprep.subr.mxu0 0.0
      %647 = vmatpush1.msra.mxu0 0.0
      %648 = vmatprep.subr.mxu0 0.0
      %649 = vmatpush1.msra.mxu0 0.0
      %650 = vmatprep.subr.mxu0 0.0
      %651 = vmatpush1.msra.mxu0 0.0
      %652 = vmatprep.subr.mxu0 0.0
      %653 = vmatpush1.msra.mxu0 0.0
      %654 = vmatprep.subr.mxu0 0.0
      %655 = vmatpush1.msra.mxu0 0.0
      %656 = vmatprep.subr.mxu0 0.0
      %657 = vmatpush1.msra.mxu0 0.0
      %658 = vmatprep.subr.mxu0 0.0
      %659 = vmatpush1.msra.mxu0 0.0
      %660 = vmatprep.subr.mxu0 0.0
      %661 = vmatpush1.msra.mxu0 0.0
      %662 = vmatprep.subr.mxu0 0.0
      %663 = vmatpush1.msra.mxu0 0.0
      %664 = vmatprep.subr.mxu0 0.0
      %665 = vmatpush1.msra.mxu0 0.0
      %666 = vmatprep.subr.mxu0 0.0
      %667 = vmatpush1.msra.mxu0 0.0
      %668 = vmatprep.subr.mxu0 0.0
      %669 = vmatpush1.msra.mxu0 0.0
      %670 = vmatprep.subr.mxu0 0.0
      %671 = vmatpush1.msra.mxu0 0.0
      %672 = vmatprep.subr.mxu0 0.0
      %673 = vmatpush1.msra.mxu0 0.0
      %674 = vmatprep.subr.mxu0 0.0
      %675 = vmatpush1.msra.mxu0 0.0
      %676 = vmatprep.subr.mxu0 0.0
      %677 = vmatpush1.msra.mxu0 0.0
      %678 = vmatprep.subr.mxu0 0.0
      %679 = vmatpush1.msra.mxu0 0.0
      %680 = vmatprep.subr.mxu0 0.0
      %681 = vmatpush1.msra.mxu0 0.0
      %682 = vmatprep.mubr.f32.mxu0 0.0
      %683 = vmatmul.mubr.f32.gmra.mrb[0].mxu0 %v616
      %v684 = vpop.f32.mrb[0].mxu0
      %v685 = vadd.f32 0.0, %v684
      %v686 = vpop.f32.mrb[0].mxu0
      %687 = vdwg.mxu0
      %688 = vrot.lane.b32.xlu0 %v519, 120
      %v689 = vpop.permute.xlu0 %688
      %690 = vrot.lane.b32.xlu0 %v519, 88
      %v691 = vpop.permute.xlu0 %690
      %v692 = vsel %vm525, %v689, 0
      %v694 = vsel %vm525, %v691, 0
      %696 = vmatprep.subr.mxu0 0.0
      %697 = vmatpush1.xpose.msra.mxu0 %v694
      %698 = vmatprep.subr.mxu0 0.0
      %699 = vmatpush1.xpose.msra.mxu0 0.0
      %700 = vmatprep.subr.mxu0 0.0
      %701 = vmatpush1.xpose.msra.mxu0 0.0
      %702 = vmatprep.subr.mxu0 0.0
      %703 = vmatpush1.xpose.msra.mxu0 0.0
      %704 = vmatprep.subr.mxu0 0.0
      %705 = vmatpush1.xpose.msra.mxu0 0.0
      %706 = vmatprep.subr.mxu0 0.0
      %707 = vmatpush1.xpose.msra.mxu0 0.0
      %708 = vmatprep.subr.mxu0 0.0
      %709 = vmatpush1.xpose.msra.mxu0 0.0
      %710 = vmatprep.subr.mxu0 0.0
      %711 = vmatpush1.xpose.msra.mxu0 0.0
      %712 = vmatprep.subr.mxu0 0.0
      %713 = vmatpush1.xpose.msra.mxu0 0.0
      %714 = vmatprep.subr.mxu0 0.0
      %715 = vmatpush1.xpose.msra.mxu0 0.0
      %716 = vmatprep.subr.mxu0 0.0
      %717 = vmatpush1.xpose.msra.mxu0 0.0
      %718 = vmatprep.subr.mxu0 0.0
      %719 = vmatpush1.xpose.msra.mxu0 0.0
      %720 = vmatprep.subr.mxu0 0.0
      %721 = vmatpush1.xpose.msra.mxu0 0.0
      %722 = vmatprep.subr.mxu0 0.0
      %723 = vmatpush1.xpose.msra.mxu0 0.0
      %724 = vmatprep.subr.mxu0 0.0
      %725 = vmatpush1.xpose.msra.mxu0 0.0
      %726 = vmatprep.subr.mxu0 0.0
      %727 = vmatpush1.xpose.msra.mxu0 0.0
      %728 = vmatprep.subr.mxu0 0.0
      %729 = vmatpush1.xpose.msra.mxu0 0.0
      %730 = vmatprep.subr.mxu0 0.0
      %731 = vmatpush1.xpose.msra.mxu0 0.0
      %732 = vmatprep.subr.mxu0 0.0
      %733 = vmatpush1.xpose.msra.mxu0 0.0
      %734 = vmatprep.subr.mxu0 0.0
      %735 = vmatpush1.xpose.msra.mxu0 0.0
      %736 = vmatprep.subr.mxu0 0.0
      %737 = vmatpush1.xpose.msra.mxu0 0.0
      %738 = vmatprep.subr.mxu0 0.0
      %739 = vmatpush1.xpose.msra.mxu0 0.0
      %740 = vmatprep.subr.mxu0 0.0
      %741 = vmatpush1.xpose.msra.mxu0 0.0
      %742 = vmatprep.subr.mxu0 0.0
      %743 = vmatpush1.xpose.msra.mxu0 0.0
      %744 = vmatprep.subr.mxu0 0.0
      %745 = vmatpush1.xpose.msra.mxu0 0.0
      %746 = vmatprep.subr.mxu0 0.0
      %747 = vmatpush1.xpose.msra.mxu0 0.0
      %748 = vmatprep.subr.mxu0 0.0
      %749 = vmatpush1.xpose.msra.mxu0 0.0
      %750 = vmatprep.subr.mxu0 0.0
      %751 = vmatpush1.xpose.msra.mxu0 0.0
      %752 = vmatprep.subr.mxu0 0.0
      %753 = vmatpush1.xpose.msra.mxu0 0.0
      %754 = vmatprep.subr.mxu0 0.0
      %755 = vmatpush1.xpose.msra.mxu0 0.0
      %756 = vmatprep.subr.mxu0 0.0
      %757 = vmatpush1.xpose.msra.mxu0 0.0
      %758 = vmatprep.subr.mxu0 0.0
      %759 = vmatpush1.xpose.msra.mxu0 0.0
      %760 = vmatprep.mubr.f32.mxu0 0.0
      %761 = vmatmul.mubr.f32.gmra.mrb[0].mxu0 %v692
      %v762 = vpop.f32.mrb[0].mxu0
      %v763 = vadd.f32 0.0, %v762
      %v764 = vpop.f32.mrb[0].mxu0
      %765 = vdwg.mxu0
      %v766 = vmul.f32 %v763, 0.35355338
      %v767 = vsel %vm525, %v766, -inf
      %768 = vmax.xlane.f32.xlu0 %v767
      %v769 = vpop.xlane.xlu0 %768
      %v770 = vsub.f32 %v766, %v769
      %v771 = vmul.f32 %v770, 1.442695
      %v772 = vpow.pop %v771
      %v773 = vsel %vm525, %v772, 0.0
      %774 = vadd.xlane.f32.xlu0 %v773
      %v775 = vpop.xlane.xlu0 %774
      %v776 = vrcp.pop %v775
      %v777 = vmul.f32 %v772, %v776
      %778 = vrot.lane.b32.xlu0 %v519, 56
      %v779 = vpop.permute.xlu0 %778
      %v782 = vsel %vm525, %v777, 0
      %784 = vmatprep.subr.mxu0 0.0
      %785 = vmatpush1.msra.mxu0 %v779
      %786 = vmatprep.subr.mxu0 0.0
      %787 = vmatpush1.msra.mxu0 0.0
      %788 = vmatprep.subr.mxu0 0.0
      %789 = vmatpush1.msra.mxu0 0.0
      %790 = vmatprep.subr.mxu0 0.0
      %791 = vmatpush1.msra.mxu0 0.0
      %792 = vmatprep.subr.mxu0 0.0
      %793 = vmatpush1.msra.mxu0 0.0
      %794 = vmatprep.subr.mxu0 0.0
      %795 = vmatpush1.msra.mxu0 0.0
      %796 = vmatprep.subr.mxu0 0.0
      %797 = vmatpush1.msra.mxu0 0.0
      %798 = vmatprep.subr.mxu0 0.0
      %799 = vmatpush1.msra.mxu0 0.0
      %800 = vmatprep.subr.mxu0 0.0
      %801 = vmatpush1.msra.mxu0 0.0
      %802 = vmatprep.subr.mxu0 0.0
      %803 = vmatpush1.msra.mxu0 0.0
      %804 = vmatprep.subr.mxu0 0.0
      %805 = vmatpush1.msra.mxu0 0.0
      %806 = vmatprep.subr.mxu0 0.0
      %807 = vmatpush1.msra.mxu0 0.0
      %808 = vmatprep.subr.mxu0 0.0
      %809 = vmatpush1.msra.mxu0 0.0
      %810 = vmatprep.subr.mxu0 0.0
      %811 = vmatpush1.msra.mxu0 0.0
      %812 = vmatprep.subr.mxu0 0.0
      %813 = vmatpush1.msra.mxu0 0.0
      %814 = vmatprep.subr.mxu0 0.0
      %815 = vmatpush1.msra.mxu0 0.0
      %816 = vmatprep.subr.mxu0 0.0
      %817 = vmatpush1.msra.mxu0 0.0
      %818 = vmatprep.subr.mxu0 0.0
      %819 = vmatpush1.msra.mxu0 0.0
      %820 = vmatprep.subr.mxu0 0.0
      %821 = vmatpush1.msra.mxu0 0.0
      %822 = vmatprep.subr.mxu0 0.0
      %823 = vmatpush1.msra.mxu0 0.0
      %824 = vmatprep.subr.mxu0 0.0
      %825 = vmatpush1.msra.mxu0 0.0
      %826 = vmatprep.subr.mxu0 0.0
      %827 = vmatpush1.msra.mxu0 0.0
      %828 = vmatprep.subr.mxu0 0.0
      %829 = vmatpush1.msra.mxu0 0.0
      %830 = vmatprep.subr.mxu0 0.0
      %831 = vmatpush1.msra.mxu0 0.0
      %832 = vmatprep.subr.mxu0 0.0
      %833 = vmatpush1.msra.mxu0 0.0
      %834 = vmatprep.subr.mxu0 0.0
      %835 = vmatpush1.msra.mxu0 0.0
      %836 = vmatprep.subr.mxu0 0.0
      %837 = vmatpush1.msra.mxu0 0.0
      %838 = vmatprep.subr.mxu0 0.0
      %839 = vmatpush1.msra.mxu0 0.0
      %840 = vmatprep.subr.mxu0 0.0
      %841 = vmatpush1.msra.mxu0 0.0
      %842 = vmatprep.subr.mxu0 0.0
      %843 = vmatpush1.msra.mxu0 0.0
      %844 = vmatprep.subr.mxu0 0.0
      %845 = vmatpush1.msra.mxu0 0.0
      %846 = vmatprep.subr.mxu0 0.0
      %847 = vmatpush1.msra.mxu0 0.0
      %848 = vmatprep.mubr.f32.mxu0 0.0
      %849 = vmatmul.mubr.f32.gmra.mrb[0].mxu0 %v782
      %v850 = vpop.f32.mrb[0].mxu0
      %v851 = vadd.f32 0.0, %v850
      %v852 = vpop.f32.mrb[0].mxu0
      %853 = vdwg.mxu0
      %854 = vrot.lane.b32.xlu0 %v519, 112
      %v855 = vpop.permute.xlu0 %854
      %856 = vrot.lane.b32.xlu0 %v519, 80
      %v857 = vpop.permute.xlu0 %856
      %v858 = vsel %vm525, %v855, 0
      %v860 = vsel %vm525, %v857, 0
      %862 = vmatprep.subr.mxu0 0.0
      %863 = vmatpush1.xpose.msra.mxu0 %v860
      %864 = vmatprep.subr.mxu0 0.0
      %865 = vmatpush1.xpose.msra.mxu0 0.0
      %866 = vmatprep.subr.mxu0 0.0
      %867 = vmatpush1.xpose.msra.mxu0 0.0
      %868 = vmatprep.subr.mxu0 0.0
      %869 = vmatpush1.xpose.msra.mxu0 0.0
      %870 = vmatprep.subr.mxu0 0.0
      %871 = vmatpush1.xpose.msra.mxu0 0.0
      %872 = vmatprep.subr.mxu0 0.0
      %873 = vmatpush1.xpose.msra.mxu0 0.0
      %874 = vmatprep.subr.mxu0 0.0
      %875 = vmatpush1.xpose.msra.mxu0 0.0
      %876 = vmatprep.subr.mxu0 0.0
      %877 = vmatpush1.xpose.msra.mxu0 0.0
      %878 = vmatprep.subr.mxu0 0.0
      %879 = vmatpush1.xpose.msra.mxu0 0.0
      %880 = vmatprep.subr.mxu0 0.0
      %881 = vmatpush1.xpose.msra.mxu0 0.0
      %882 = vmatprep.subr.mxu0 0.0
      %883 = vmatpush1.xpose.msra.mxu0 0.0
      %884 = vmatprep.subr.mxu0 0.0
      %885 = vmatpush1.xpose.msra.mxu0 0.0
      %886 = vmatprep.subr.mxu0 0.0
      %887 = vmatpush1.xpose.msra.mxu0 0.0
      %888 = vmatprep.subr.mxu0 0.0
      %889 = vmatpush1.xpose.msra.mxu0 0.0
      %890 = vmatprep.subr.mxu0 0.0
      %891 = vmatpush1.xpose.msra.mxu0 0.0
      %892 = vmatprep.subr.mxu0 0.0
      %893 = vmatpush1.xpose.msra.mxu0 0.0
      %894 = vmatprep.subr.mxu0 0.0
      %895 = vmatpush1.xpose.msra.mxu0 0.0
      %896 = vmatprep.subr.mxu0 0.0
      %897 = vmatpush1.xpose.msra.mxu0 0.0
      %898 = vmatprep.subr.mxu0 0.0
      %899 = vmatpush1.xpose.msra.mxu0 0.0
      %900 = vmatprep.subr.mxu0 0.0
      %901 = vmatpush1.xpose.msra.mxu0 0.0
      %902 = vmatprep.subr.mxu0 0.0
      %903 = vmatpush1.xpose.msra.mxu0 0.0
      %904 = vmatprep.subr.mxu0 0.0
      %905 = vmatpush1.xpose.msra.mxu0 0.0
      %906 = vmatprep.subr.mxu0 0.0
      %907 = vmatpush1.xpose.msra.mxu0 0.0
      %908 = vmatprep.subr.mxu0 0.0
      %909 = vmatpush1.xpose.msra.mxu0 0.0
      %910 = vmatprep.subr.mxu0 0.0
      %911 = vmatpush1.xpose.msra.mxu0 0.0
      %912 = vmatprep.subr.mxu0 0.0
      %913 = vmatpush1.xpose.msra.mxu0 0.0
      %914 = vmatprep.subr.mxu0 0.0
      %915 = vmatpush1.xpose.msra.mxu0 0.0
      %916 = vmatprep.subr.mxu0 0.0
      %917 = vmatpush1.xpose.msra.mxu0 0.0
      %918 = vmatprep.subr.mxu0 0.0
      %919 = vmatpush1.xpose.msra.mxu0 0.0
      %920 = vmatprep.subr.mxu0 0.0
      %921 = vmatpush1.xpose.msra.mxu0 0.0
      %922 = vmatprep.subr.mxu0 0.0
      %923 = vmatpush1.xpose.msra.mxu0 0.0
      %924 = vmatprep.subr.mxu0 0.0
      %925 = vmatpush1.xpose.msra.mxu0 0.0
      %926 = vmatprep.mubr.f32.mxu0 0.0
      %927 = vmatmul.mubr.f32.gmra.mrb[0].mxu0 %v858
      %v928 = vpop.f32.mrb[0].mxu0
      %v929 = vadd.f32 0.0, %v928
      %v930 = vpop.f32.mrb[0].mxu0
      %931 = vdwg.mxu0
      %v932 = vmul.f32 %v929, 0.35355338
      %v933 = vsel %vm525, %v932, -inf
      %934 = vmax.xlane.f32.xlu0 %v933
      %v935 = vpop.xlane.xlu0 %934
      %v936 = vsub.f32 %v932, %v935
      %v937 = vmul.f32 %v936, 1.442695
      %v938 = vpow.pop %v937
      %v939 = vsel %vm525, %v938, 0.0
      %940 = vadd.xlane.f32.xlu0 %v939
      %v941 = vpop.xlane.xlu0 %940
      %v942 = vrcp.pop %v941
      %v943 = vmul.f32 %v938, %v942
      %944 = vrot.lane.b32.xlu0 %v519, 48
      %v945 = vpop.permute.xlu0 %944
      %v948 = vsel %vm525, %v943, 0
      %950 = vmatprep.subr.mxu0 0.0
      %951 = vmatpush1.msra.mxu0 %v945
      %952 = vmatprep.subr.mxu0 0.0
      %953 = vmatpush1.msra.mxu0 0.0
      %954 = vmatprep.subr.mxu0 0.0
      %955 = vmatpush1.msra.mxu0 0.0
      %956 = vmatprep.subr.mxu0 0.0
      %957 = vmatpush1.msra.mxu0 0.0
      %958 = vmatprep.subr.mxu0 0.0
      %959 = vmatpush1.msra.mxu0 0.0
      %960 = vmatprep.subr.mxu0 0.0
      %961 = vmatpush1.msra.mxu0 0.0
      %962 = vmatprep.subr.mxu0 0.0
      %963 = vmatpush1.msra.mxu0 0.0
      %964 = vmatprep.subr.mxu0 0.0
      %965 = vmatpush1.msra.mxu0 0.0
      %966 = vmatprep.subr.mxu0 0.0
      %967 = vmatpush1.msra.mxu0 0.0
      %968 = vmatprep.subr.mxu0 0.0
      %969 = vmatpush1.msra.mxu0 0.0
      %970 = vmatprep.subr.mxu0 0.0
      %971 = vmatpush1.msra.mxu0 0.0
      %972 = vmatprep.subr.mxu0 0.0
      %973 = vmatpush1.msra.mxu0 0.0
      %974 = vmatprep.subr.mxu0 0.0
      %975 = vmatpush1.msra.mxu0 0.0
      %976 = vmatprep.subr.mxu0 0.0
      %977 = vmatpush1.msra.mxu0 0.0
      %978 = vmatprep.subr.mxu0 0.0
      %979 = vmatpush1.msra.mxu0 0.0
      %980 = vmatprep.subr.mxu0 0.0
      %981 = vmatpush1.msra.mxu0 0.0
      %982 = vmatprep.subr.mxu0 0.0
      %983 = vmatpush1.msra.mxu0 0.0
      %984 = vmatprep.subr.mxu0 0.0
      %985 = vmatpush1.msra.mxu0 0.0
      %986 = vmatprep.subr.mxu0 0.0
      %987 = vmatpush1.msra.mxu0 0.0
      %988 = vmatprep.subr.mxu0 0.0
      %989 = vmatpush1.msra.mxu0 0.0
      %990 = vmatprep.subr.mxu0 0.0
      %991 = vmatpush1.msra.mxu0 0.0
      %992 = vmatprep.subr.mxu0 0.0
      %993 = vmatpush1.msra.mxu0 0.0
      %994 = vmatprep.subr.mxu0 0.0
      %995 = vmatpush1.msra.mxu0 0.0
      %996 = vmatprep.subr.mxu0 0.0
      %997 = vmatpush1.msra.mxu0 0.0
      %998 = vmatprep.subr.mxu0 0.0
      %999 = vmatpush1.msra.mxu0 0.0
      %1000 = vmatprep.subr.mxu0 0.0
      %1001 = vmatpush1.msra.mxu0 0.0
      %1002 = vmatprep.subr.mxu0 0.0
      %1003 = vmatpush1.msra.mxu0 0.0
      %1004 = vmatprep.subr.mxu0 0.0
      %1005 = vmatpush1.msra.mxu0 0.0
      %1006 = vmatprep.subr.mxu0 0.0
      %1007 = vmatpush1.msra.mxu0 0.0
      %1008 = vmatprep.subr.mxu0 0.0
      %1009 = vmatpush1.msra.mxu0 0.0
      %1010 = vmatprep.subr.mxu0 0.0
      %1011 = vmatpush1.msra.mxu0 0.0
      %1012 = vmatprep.subr.mxu0 0.0
      %1013 = vmatpush1.msra.mxu0 0.0
      %1014 = vmatprep.mubr.f32.mxu0 0.0
      %1015 = vmatmul.mubr.f32.gmra.mrb[0].mxu0 %v948
      %v1016 = vpop.f32.mrb[0].mxu0
      %v1017 = vadd.f32 0.0, %v1016
      %v1018 = vpop.f32.mrb[0].mxu0
      %1019 = vdwg.mxu0
      %1020 = vrot.lane.b32.xlu0 %v519, 104
      %v1021 = vpop.permute.xlu0 %1020
      %1022 = vrot.lane.b32.xlu0 %v519, 72
      %v1023 = vpop.permute.xlu0 %1022
      %v1024 = vsel %vm525, %v1021, 0
      %v1026 = vsel %vm525, %v1023, 0
      %1028 = vmatprep.subr.mxu0 0.0
      %1029 = vmatpush1.xpose.msra.mxu0 %v1026
      %1030 = vmatprep.subr.mxu0 0.0
      %1031 = vmatpush1.xpose.msra.mxu0 0.0
      %1032 = vmatprep.subr.mxu0 0.0
      %1033 = vmatpush1.xpose.msra.mxu0 0.0
      %1034 = vmatprep.subr.mxu0 0.0
      %1035 = vmatpush1.xpose.msra.mxu0 0.0
      %1036 = vmatprep.subr.mxu0 0.0
      %1037 = vmatpush1.xpose.msra.mxu0 0.0
      %1038 = vmatprep.subr.mxu0 0.0
      %1039 = vmatpush1.xpose.msra.mxu0 0.0
      %1040 = vmatprep.subr.mxu0 0.0
      %1041 = vmatpush1.xpose.msra.mxu0 0.0
      %1042 = vmatprep.subr.mxu0 0.0
      %1043 = vmatpush1.xpose.msra.mxu0 0.0
      %1044 = vmatprep.subr.mxu0 0.0
      %1045 = vmatpush1.xpose.msra.mxu0 0.0
      %1046 = vmatprep.subr.mxu0 0.0
      %1047 = vmatpush1.xpose.msra.mxu0 0.0
      %1048 = vmatprep.subr.mxu0 0.0
      %1049 = vmatpush1.xpose.msra.mxu0 0.0
      %1050 = vmatprep.subr.mxu0 0.0
      %1051 = vmatpush1.xpose.msra.mxu0 0.0
      %1052 = vmatprep.subr.mxu0 0.0
      %1053 = vmatpush1.xpose.msra.mxu0 0.0
      %1054 = vmatprep.subr.mxu0 0.0
      %1055 = vmatpush1.xpose.msra.mxu0 0.0
      %1056 = vmatprep.subr.mxu0 0.0
      %1057 = vmatpush1.xpose.msra.mxu0 0.0
      %1058 = vmatprep.subr.mxu0 0.0
      %1059 = vmatpush1.xpose.msra.mxu0 0.0
      %1060 = vmatprep.subr.mxu0 0.0
      %1061 = vmatpush1.xpose.msra.mxu0 0.0
      %1062 = vmatprep.subr.mxu0 0.0
      %1063 = vmatpush1.xpose.msra.mxu0 0.0
      %1064 = vmatprep.subr.mxu0 0.0
      %1065 = vmatpush1.xpose.msra.mxu0 0.0
      %1066 = vmatprep.subr.mxu0 0.0
      %1067 = vmatpush1.xpose.msra.mxu0 0.0
      %1068 = vmatprep.subr.mxu0 0.0
      %1069 = vmatpush1.xpose.msra.mxu0 0.0
      %1070 = vmatprep.subr.mxu0 0.0
      %1071 = vmatpush1.xpose.msra.mxu0 0.0
      %1072 = vmatprep.subr.mxu0 0.0
      %1073 = vmatpush1.xpose.msra.mxu0 0.0
      %1074 = vmatprep.subr.mxu0 0.0
      %1075 = vmatpush1.xpose.msra.mxu0 0.0
      %1076 = vmatprep.subr.mxu0 0.0
      %1077 = vmatpush1.xpose.msra.mxu0 0.0
      %1078 = vmatprep.subr.mxu0 0.0
      %1079 = vmatpush1.xpose.msra.mxu0 0.0
      %1080 = vmatprep.subr.mxu0 0.0
      %1081 = vmatpush1.xpose.msra.mxu0 0.0
      %1082 = vmatprep.subr.mxu0 0.0
      %1083 = vmatpush1.xpose.msra.mxu0 0.0
      %1084 = vmatprep.subr.mxu0 0.0
      %1085 = vmatpush1.xpose.msra.mxu0 0.0
      %1086 = vmatprep.subr.mxu0 0.0
      %1087 = vmatpush1.xpose.msra.mxu0 0.0
      %1088 = vmatprep.subr.mxu0 0.0
      %1089 = vmatpush1.xpose.msra.mxu0 0.0
      %1090 = vmatprep.subr.mxu0 0.0
      %1091 = vmatpush1.xpose.msra.mxu0 0.0
      %1092 = vmatprep.mubr.f32.mxu0 0.0
      %1093 = vmatmul.mubr.f32.gmra.mrb[0].mxu0 %v1024
      %v1094 = vpop.f32.mrb[0].mxu0
      %v1095 = vadd.f32 0.0, %v1094
      %v1096 = vpop.f32.mrb[0].mxu0
      %1097 = vdwg.mxu0
      %v1098 = vmul.f32 %v1095, 0.35355338
      %v1099 = vsel %vm525, %v1098, -inf
      %1100 = vmax.xlane.f32.xlu0 %v1099
      %v1101 = vpop.xlane.xlu0 %1100
      %v1102 = vsub.f32 %v1098, %v1101
      %v1103 = vmul.f32 %v1102, 1.442695
      %v1104 = vpow.pop %v1103
      %v1105 = vsel %vm525, %v1104, 0.0
      %1106 = vadd.xlane.f32.xlu0 %v1105
      %v1107 = vpop.xlane.xlu0 %1106
      %v1108 = vrcp.pop %v1107
      %v1109 = vmul.f32 %v1104, %v1108
      %1110 = vrot.lane.b32.xlu0 %v519, 40
      %v1111 = vpop.permute.xlu0 %1110
      %v1114 = vsel %vm525, %v1109, 0
      %1116 = vmatprep.subr.mxu0 0.0
      %1117 = vmatpush1.msra.mxu0 %v1111
      %1118 = vmatprep.subr.mxu0 0.0
      %1119 = vmatpush1.msra.mxu0 0.0
      %1120 = vmatprep.subr.mxu0 0.0
      %1121 = vmatpush1.msra.mxu0 0.0
      %1122 = vmatprep.subr.mxu0 0.0
      %1123 = vmatpush1.msra.mxu0 0.0
      %1124 = vmatprep.subr.mxu0 0.0
      %1125 = vmatpush1.msra.mxu0 0.0
      %1126 = vmatprep.subr.mxu0 0.0
      %1127 = vmatpush1.msra.mxu0 0.0
      %1128 = vmatprep.subr.mxu0 0.0
      %1129 = vmatpush1.msra.mxu0 0.0
      %1130 = vmatprep.subr.mxu0 0.0
      %1131 = vmatpush1.msra.mxu0 0.0
      %1132 = vmatprep.subr.mxu0 0.0
      %1133 = vmatpush1.msra.mxu0 0.0
      %1134 = vmatprep.subr.mxu0 0.0
      %1135 = vmatpush1.msra.mxu0 0.0
      %1136 = vmatprep.subr.mxu0 0.0
      %1137 = vmatpush1.msra.mxu0 0.0
      %1138 = vmatprep.subr.mxu0 0.0
      %1139 = vmatpush1.msra.mxu0 0.0
      %1140 = vmatprep.subr.mxu0 0.0
      %1141 = vmatpush1.msra.mxu0 0.0
      %1142 = vmatprep.subr.mxu0 0.0
      %1143 = vmatpush1.msra.mxu0 0.0
      %1144 = vmatprep.subr.mxu0 0.0
      %1145 = vmatpush1.msra.mxu0 0.0
      %1146 = vmatprep.subr.mxu0 0.0
      %1147 = vmatpush1.msra.mxu0 0.0
      %1148 = vmatprep.subr.mxu0 0.0
      %1149 = vmatpush1.msra.mxu0 0.0
      %1150 = vmatprep.subr.mxu0 0.0
      %1151 = vmatpush1.msra.mxu0 0.0
      %1152 = vmatprep.subr.mxu0 0.0
      %1153 = vmatpush1.msra.mxu0 0.0
      %1154 = vmatprep.subr.mxu0 0.0
      %1155 = vmatpush1.msra.mxu0 0.0
      %1156 = vmatprep.subr.mxu0 0.0
      %1157 = vmatpush1.msra.mxu0 0.0
      %1158 = vmatprep.subr.mxu0 0.0
      %1159 = vmatpush1.msra.mxu0 0.0
      %1160 = vmatprep.subr.mxu0 0.0
      %1161 = vmatpush1.msra.mxu0 0.0
      %1162 = vmatprep.subr.mxu0 0.0
      %1163 = vmatpush1.msra.mxu0 0.0
      %1164 = vmatprep.subr.mxu0 0.0
      %1165 = vmatpush1.msra.mxu0 0.0
      %1166 = vmatprep.subr.mxu0 0.0
      %1167 = vmatpush1.msra.mxu0 0.0
      %1168 = vmatprep.subr.mxu0 0.0
      %1169 = vmatpush1.msra.mxu0 0.0
      %1170 = vmatprep.subr.mxu0 0.0
      %1171 = vmatpush1.msra.mxu0 0.0
      %1172 = vmatprep.subr.mxu0 0.0
      %1173 = vmatpush1.msra.mxu0 0.0
      %1174 = vmatprep.subr.mxu0 0.0
      %1175 = vmatpush1.msra.mxu0 0.0
      %1176 = vmatprep.subr.mxu0 0.0
      %1177 = vmatpush1.msra.mxu0 0.0
      %1178 = vmatprep.subr.mxu0 0.0
      %1179 = vmatpush1.msra.mxu0 0.0
      %1180 = vmatprep.mubr.f32.mxu0 0.0
      %1181 = vmatmul.mubr.f32.gmra.mrb[0].mxu0 %v1114
      %v1182 = vpop.f32.mrb[0].mxu0
      %v1183 = vadd.f32 0.0, %v1182
      %v1184 = vpop.f32.mrb[0].mxu0
      %1185 = vdwg.mxu0
      %1187 = vrot.lane.b32.xlu0 %v851, 8
      %v1188 = vpop.permute.xlu0 %1187
      %1191 = vrot.lane.b32.xlu0 %v1017, 16
      %v1192 = vpop.permute.xlu0 %1191
      %1195 = vrot.lane.b32.xlu0 %v1183, 24
      %v1196 = vpop.permute.xlu0 %1195
      %v1198 = vsel %vm525, %v685, %v1188
      %vm1199 = vcmask 130048
      %v1200 = vsel %vm1199, %v1198, %v1192
      %vm1201 = vcmask 195584
      %v1202 = vsel %vm1201, %v1200, %v1196
      %v1203 = vld [vmem:[%s3] sm:$0xff]
      %v1204 = vld [vmem:[%s3 + $0x8] sm:$0xff]
      %v1205 = vld [vmem:[%s3 + $0x10] sm:$0xff]
      %v1206 = vld [vmem:[%s3 + $0x18] sm:$0xff]
      %v1207 = vld [vmem:[%s4] sm:$0x1]
      %v1209 = vlaneseq
      %v1210 = vshrl.u32 %v1209, 7
      %v1211 = vsub.s32 0, %v1210
      %v1212 = vrot.slane %v1207, %v1211
      %v1215 = vsel %vm448, %v1202, 0
      %1217 = vmatprep.subr.mxu0 0.0
      %1218 = vmatpush1.msra.mxu0 %v1203
      %1219 = vmatprep.subr.mxu0 0.0
      %1220 = vmatpush1.msra.mxu0 %v1204
      %1221 = vmatprep.subr.mxu0 0.0
      %1222 = vmatpush1.msra.mxu0 %v1205
      %1223 = vmatprep.subr.mxu0 0.0
      %1224 = vmatpush1.msra.mxu0 %v1206
      %1225 = vmatprep.subr.mxu0 0.0
      %1226 = vmatpush1.msra.mxu0 0.0
      %1227 = vmatprep.subr.mxu0 0.0
      %1228 = vmatpush1.msra.mxu0 0.0
      %1229 = vmatprep.subr.mxu0 0.0
      %1230 = vmatpush1.msra.mxu0 0.0
      %1231 = vmatprep.subr.mxu0 0.0
      %1232 = vmatpush1.msra.mxu0 0.0
      %1233 = vmatprep.subr.mxu0 0.0
      %1234 = vmatpush1.msra.mxu0 0.0
      %1235 = vmatprep.subr.mxu0 0.0
      %1236 = vmatpush1.msra.mxu0 0.0
      %1237 = vmatprep.subr.mxu0 0.0
      %1238 = vmatpush1.msra.mxu0 0.0
      %1239 = vmatprep.subr.mxu0 0.0
      %1240 = vmatpush1.msra.mxu0 0.0
      %1241 = vmatprep.subr.mxu0 0.0
      %1242 = vmatpush1.msra.mxu0 0.0
      %1243 = vmatprep.subr.mxu0 0.0
      %1244 = vmatpush1.msra.mxu0 0.0
      %1245 = vmatprep.subr.mxu0 0.0
      %1246 = vmatpush1.msra.mxu0 0.0
      %1247 = vmatprep.subr.mxu0 0.0
      %1248 = vmatpush1.msra.mxu0 0.0
      %1249 = vmatprep.subr.mxu0 0.0
      %1250 = vmatpush1.msra.mxu0 0.0
      %1251 = vmatprep.subr.mxu0 0.0
      %1252 = vmatpush1.msra.mxu0 0.0
      %1253 = vmatprep.subr.mxu0 0.0
      %1254 = vmatpush1.msra.mxu0 0.0
      %1255 = vmatprep.subr.mxu0 0.0
      %1256 = vmatpush1.msra.mxu0 0.0
      %1257 = vmatprep.subr.mxu0 0.0
      %1258 = vmatpush1.msra.mxu0 0.0
      %1259 = vmatprep.subr.mxu0 0.0
      %1260 = vmatpush1.msra.mxu0 0.0
      %1261 = vmatprep.subr.mxu0 0.0
      %1262 = vmatpush1.msra.mxu0 0.0
      %1263 = vmatprep.subr.mxu0 0.0
      %1264 = vmatpush1.msra.mxu0 0.0
      %1265 = vmatprep.subr.mxu0 0.0
      %1266 = vmatpush1.msra.mxu0 0.0
      %1267 = vmatprep.subr.mxu0 0.0
      %1268 = vmatpush1.msra.mxu0 0.0
      %1269 = vmatprep.subr.mxu0 0.0
      %1270 = vmatpush1.msra.mxu0 0.0
      %1271 = vmatprep.subr.mxu0 0.0
      %1272 = vmatpush1.msra.mxu0 0.0
      %1273 = vmatprep.subr.mxu0 0.0
      %1274 = vmatpush1.msra.mxu0 0.0
      %1275 = vmatprep.subr.mxu0 0.0
      %1276 = vmatpush1.msra.mxu0 0.0
      %1277 = vmatprep.subr.mxu0 0.0
      %1278 = vmatpush1.msra.mxu0 0.0
      %1279 = vmatprep.subr.mxu0 0.0
      %1280 = vmatpush1.msra.mxu0 0.0
      %1281 = vmatprep.mubr.f32.mxu0 0.0
      %1282 = vmatmul.mubr.f32.gmra.mrb[0].mxu0 %v1215
      %v1283 = vpop.f32.mrb[0].mxu0
      %v1284 = vadd.f32 %v1212, %v1283
      %v1285 = vpop.f32.mrb[0].mxu0
      %1286 = vdwg.mxu0
      %v1287 = vadd.f32 %v436, %v1284
      %v1288 = vld [vmem:[%s5] sm:$0x1]
      %v1289 = vld [vmem:[%s6] sm:$0x1]
      %v1290 = vsel %vm448, %v1287, 0.0
      %1291 = vadd.xlane.f32.xlu0 %v1290
      %v1292 = vpop.xlane.xlu0 %1291
      %v1293 = vrcp.pop 32.0
      %v1294 = vmul.f32 %v1292, %v1293
      %v1295 = vmul.f32 %v1287, %v1287
      %v1296 = vsel %vm448, %v1295, 0.0
      %1297 = vadd.xlane.f32.xlu0 %v1296
      %v1298 = vpop.xlane.xlu0 %1297
      %v1299 = vmul.f32 %v1298, %v1293
      %v1300 = vmul.f32 %v1294, %v1294
      %v1301 = vsub.f32 %v1299, %v1300
      %v1302 = vsub.f32 %v1287, %v1294
      %v1303 = vadd.f32 %v1301, 1e-05
      %v1304 = vrsqrt.pop %v1303
      %v1305 = vmul.f32 %v1302, %v1304
      %v1307 = vlaneseq
      %v1308 = vshrl.u32 %v1307, 7
      %v1309 = vsub.s32 0, %v1308
      %v1310 = vrot.slane %v1288, %v1309
      %v1312 = vmul.f32 %v1305, %v1310
      %v1314 = vlaneseq
      %v1315 = vshrl.u32 %v1314, 7
      %v1316 = vsub.s32 0, %v1315
      %v1317 = vrot.slane %v1289, %v1316
      %v1319 = vadd.f32 %v1312, %v1317
      %v1320 = vld [vmem:[%s7] sm:$0xff]
      %v1321 = vld [vmem:[%s7 + $0x8] sm:$0xff]
      %v1322 = vld [vmem:[%s7 + $0x10] sm:$0xff]
      %v1323 = vld [vmem:[%s7 + $0x18] sm:$0xff]
      %v1324 = vld [vmem:[%s8] sm:$0x1]
      %v1326 = vlaneseq
      %v1327 = vshrl.u32 %v1326, 7
      %v1328 = vsub.s32 0, %v1327
      %v1329 = vrot.slane %v1324, %v1328
      %v1332 = vsel %vm448, %v1319, 0
      %1334 = vmatprep.subr.mxu0 0.0
      %1335 = vmatpush1.msra.mxu0 %v1320
      %1336 = vmatprep.subr.mxu0 0.0
      %1337 = vmatpush1.msra.mxu0 %v1321
      %1338 = vmatprep.subr.mxu0 0.0
      %1339 = vmatpush1.msra.mxu0 %v1322
      %1340 = vmatprep.subr.mxu0 0.0
      %1341 = vmatpush1.msra.mxu0 %v1323
      %1342 = vmatprep.subr.mxu0 0.0
      %1343 = vmatpush1.msra.mxu0 0.0
      %1344 = vmatprep.subr.mxu0 0.0
      %1345 = vmatpush1.msra.mxu0 0.0
      %1346 = vmatprep.subr.mxu0 0.0
      %1347 = vmatpush1.msra.mxu0 0.0
      %1348 = vmatprep.subr.mxu0 0.0
      %1349 = vmatpush1.msra.mxu0 0.0
      %1350 = vmatprep.subr.mxu0 0.0
      %1351 = vmatpush1.msra.mxu0 0.0
      %1352 = vmatprep.subr.mxu0 0.0
      %1353 = vmatpush1.msra.mxu0 0.0
      %1354 = vmatprep.subr.mxu0 0.0
      %1355 = vmatpush1.msra.mxu0 0.0
      %1356 = vmatprep.subr.mxu0 0.0
      %1357 = vmatpush1.msra.mxu0 0.0
      %1358 = vmatprep.subr.mxu0 0.0
      %1359 = vmatpush1.msra.mxu0 0.0
      %1360 = vmatprep.subr.mxu0 0.0
      %1361 = vmatpush1.msra.mxu0 0.0
      %1362 = vmatprep.subr.mxu0 0.0
      %1363 = vmatpush1.msra.mxu0 0.0
      %1364 = vmatprep.subr.mxu0 0.0
      %1365 = vmatpush1.msra.mxu0 0.0
      %1366 = vmatprep.subr.mxu0 0.0
      %1367 = vmatpush1.msra.mxu0 0.0
      %1368 = vmatprep.subr.mxu0 0.0
      %1369 = vmatpush1.msra.mxu0 0.0
      %1370 = vmatprep.subr.mxu0 0.0
      %1371 = vmatpush1.msra.mxu0 0.0
      %1372 = vmatprep.subr.mxu0 0.0
      %1373 = vmatpush1.msra.mxu0 0.0
      %1374 = vmatprep.subr.mxu0 0.0
      %1375 = vmatpush1.msra.mxu0 0.0
      %1376 = vmatprep.subr.mxu0 0.0
      %1377 = vmatpush1.msra.mxu0 0.0
      %1378 = vmatprep.subr.mxu0 0.0
      %1379 = vmatpush1.msra.mxu0 0.0
      %1380 = vmatprep.subr.mxu0 0.0
      %1381 = vmatpush1.msra.mxu0 0.0
      %1382 = vmatprep.subr.mxu0 0.0
      %1383 = vmatpush1.msra.mxu0 0.0
      %1384 = vmatprep.subr.mxu0 0.0
      %1385 = vmatpush1.msra.mxu0 0.0
      %1386 = vmatprep.subr.mxu0 0.0
      %1387 = vmatpush1.msra.mxu0 0.0
      %1388 = vmatprep.subr.mxu0 0.0
      %1389 = vmatpush1.msra.mxu0 0.0
      %1390 = vmatprep.subr.mxu0 0.0
      %1391 = vmatpush1.msra.mxu0 0.0
      %1392 = vmatprep.subr.mxu0 0.0
      %1393 = vmatpush1.msra.mxu0 0.0
      %1394 = vmatprep.subr.mxu0 0.0
      %1395 = vmatpush1.msra.mxu0 0.0
      %1396 = vmatprep.subr.mxu0 0.0
      %1397 = vmatpush1.msra.mxu0 0.0
      %1398 = vmatprep.mubr.f32.mxu0 0.0
      %1399 = vmatmul.mubr.f32.gmra.mrb[0].mxu0 %v1332
      %v1400 = vpop.f32.mrb[0].mxu0
      %v1401 = vadd.f32 %v1329, %v1400
      %v1402 = vpop.f32.mrb[0].mxu0
      %1403 = vdwg.mxu0
      %v1404 = vmax.f32 %v1401, 0.0
      %v1405 = vld [vmem:[%s9] sm:$0xff]
      %v1406 = vld [vmem:[%s9 + $0x8] sm:$0xff]
      %v1407 = vld [vmem:[%s9 + $0x10] sm:$0xff]
      %v1408 = vld [vmem:[%s9 + $0x18] sm:$0xff]
      %v1409 = vld [vmem:[%s9 + $0x20] sm:$0xff]
      %v1410 = vld [vmem:[%s9 + $0x28] sm:$0xff]
      %v1411 = vld [vmem:[%s9 + $0x30] sm:$0xff]
      %v1412 = vld [vmem:[%s9 + $0x38] sm:$0xff]
      %v1413 = vld [vmem:[%s10] sm:$0x1]
      %v1415 = vlaneseq
      %v1416 = vshrl.u32 %v1415, 7
      %v1417 = vsub.s32 0, %v1416
      %v1418 = vrot.slane %v1413, %v1417
      %vm1420 = vcmask 523264
      %v1422 = vsel %vm1420, %v1404, 0
      %1424 = vmatprep.subr.mxu0 0.0
      %1425 = vmatpush1.msra.mxu0 %v1405
      %1426 = vmatprep.subr.mxu0 0.0
      %1427 = vmatpush1.msra.mxu0 %v1406
      %1428 = vmatprep.subr.mxu0 0.0
      %1429 = vmatpush1.msra.mxu0 %v1407
      %1430 = vmatprep.subr.mxu0 0.0
      %1431 = vmatpush1.msra.mxu0 %v1408
      %1432 = vmatprep.subr.mxu0 0.0
      %1433 = vmatpush1.msra.mxu0 %v1409
      %1434 = vmatprep.subr.mxu0 0.0
      %1435 = vmatpush1.msra.mxu0 %v1410
      %1436 = vmatprep.subr.mxu0 0.0
      %1437 = vmatpush1.msra.mxu0 %v1411
      %1438 = vmatprep.subr.mxu0 0.0
      %1439 = vmatpush1.msra.mxu0 %v1412
      %1440 = vmatprep.subr.mxu0 0.0
      %1441 = vmatpush1.msra.mxu0 0.0
      %1442 = vmatprep.subr.mxu0 0.0
      %1443 = vmatpush1.msra.mxu0 0.0
      %1444 = vmatprep.subr.mxu0 0.0
      %1445 = vmatpush1.msra.mxu0 0.0
      %1446 = vmatprep.subr.mxu0 0.0
      %1447 = vmatpush1.msra.mxu0 0.0
      %1448 = vmatprep.subr.mxu0 0.0
      %1449 = vmatpush1.msra.mxu0 0.0
      %1450 = vmatprep.subr.mxu0 0.0
      %1451 = vmatpush1.msra.mxu0 0.0
      %1452 = vmatprep.subr.mxu0 0.0
      %1453 = vmatpush1.msra.mxu0 0.0
      %1454 = vmatprep.subr.mxu0 0.0
      %1455 = vmatpush1.msra.mxu0 0.0
      %1456 = vmatprep.subr.mxu0 0.0
      %1457 = vmatpush1.msra.mxu0 0.0
      %1458 = vmatprep.subr.mxu0 0.0
      %1459 = vmatpush1.msra.mxu0 0.0
      %1460 = vmatprep.subr.mxu0 0.0
      %1461 = vmatpush1.msra.mxu0 0.0
      %1462 = vmatprep.subr.mxu0 0.0
      %1463 = vmatpush1.msra.mxu0 0.0
      %1464 = vmatprep.subr.mxu0 0.0
      %1465 = vmatpush1.msra.mxu0 0.0
      %1466 = vmatprep.subr.mxu0 0.0
      %1467 = vmatpush1.msra.mxu0 0.0
      %1468 = vmatprep.subr.mxu0 0.0
      %1469 = vmatpush1.msra.mxu0 0.0
      %1470 = vmatprep.subr.mxu0 0.0
      %1471 = vmatpush1.msra.mxu0 0.0
      %1472 = vmatprep.subr.mxu0 0.0
      %1473 = vmatpush1.msra.mxu0 0.0
      %1474 = vmatprep.subr.mxu0 0.0
      %1475 = vmatpush1.msra.mxu0 0.0
      %1476 = vmatprep.subr.mxu0 0.0
      %1477 = vmatpush1.msra.mxu0 0.0
      %1478 = vmatprep.subr.mxu0 0.0
      %1479 = vmatpush1.msra.mxu0 0.0
      %1480 = vmatprep.subr.mxu0 0.0
      %1481 = vmatpush1.msra.mxu0 0.0
      %1482 = vmatprep.subr.mxu0 0.0
      %1483 = vmatpush1.msra.mxu0 0.0
      %1484 = vmatprep.subr.mxu0 0.0
      %1485 = vmatpush1.msra.mxu0 0.0
      %1486 = vmatprep.subr.mxu0 0.0
      %1487 = vmatpush1.msra.mxu0 0.0
      %1488 = vmatprep.mubr.f32.mxu0 0.0
      %1489 = vmatmul.mubr.f32.gmra.mrb[0].mxu0 %v1422
      %v1490 = vpop.f32.mrb[0].mxu0
      %v1491 = vadd.f32 %v1418, %v1490
      %v1492 = vpop.f32.mrb[0].mxu0
      %1493 = vdwg.mxu0
      %v1494 = vadd.f32 %v1319, %v1491
      %v1495 = vld [vmem:[%s11] sm:$0x1]
      %v1496 = vld [vmem:[%s12] sm:$0x1]
      %v1497 = vsel %vm448, %v1494, 0.0
      %1498 = vadd.xlane.f32.xlu0 %v1497
      %v1499 = vpop.xlane.xlu0 %1498
      %v1500 = vmul.f32 %v1499, %v1293
      %v1501 = vmul.f32 %v1494, %v1494
      %v1502 = vsel %vm448, %v1501, 0.0
      %1503 = vadd.xlane.f32.xlu0 %v1502
      %v1504 = vpop.xlane.xlu0 %1503
      %v1505 = vmul.f32 %v1504, %v1293
      %v1506 = vmul.f32 %v1500, %v1500
      %v1507 = vsub.f32 %v1505, %v1506
      %v1508 = vsub.f32 %v1494, %v1500
      %v1509 = vadd.f32 %v1507, 1e-05
      %v1510 = vrsqrt.pop %v1509
      %v1511 = vmul.f32 %v1508, %v1510
      %v1513 = vlaneseq
      %v1514 = vshrl.u32 %v1513, 7
      %v1515 = vsub.s32 0, %v1514
      %v1516 = vrot.slane %v1495, %v1515
      %v1518 = vmul.f32 %v1511, %v1516
      %v1520 = vlaneseq
      %v1521 = vshrl.u32 %v1520, 7
      %v1522 = vsub.s32 0, %v1521
      %v1523 = vrot.slane %v1496, %v1522
      %v1525 = vadd.f32 %v1518, %v1523
      %1526 = vst.msk [vmem:[%s435] sm:$0xff] %vm448, %v1525
      %p1527 = scmp.lt.s32.totalorder %s24, 1
      %s1528 = scalar_select %p1527, %s24, 1
      %s1529 = smul.addr %s1528, 8
      %s1530 = scalar_lea.vmem %s13, %s1529
      // Predicated region
      $region73: #{forward.3} parent=71 // pred_check
        %p1531 = pneg %p320
      $region74: #{forward.3} parent=71 // pred_check_branch
        %1533 = sbr.rel (%p1531) target = $region76
      $region75: #{forward.3} parent=71 // pred_region
        _
      $region76: #{forward.3} parent=71 // pred_fallthru
        _
    $region72: #{forward.3} parent=5 // pred_fallthru
      _
    %p1534 = scmp.le.s32.totalorder 2, %s19
    // Predicated region
    $region77: #{forward.3} parent=5 // pred_check
      %p1535 = pneg %p1534
    $region78: #{forward.3} parent=5 // pred_check_branch
      %1537 = sbr.rel (%p1535) target = $region80
    $region79: #{forward.3} parent=5 // pred_region
      %s1538 = ssub.s32 %s19, 2
      // Predicated region
      $region81: #{forward.3} parent=79 // pred_check
        %p1539 = pneg %p326
      $region82: #{forward.3} parent=79 // pred_check_branch
        %1541 = sbr.rel (%p1539) target = $region84
      $region83: #{forward.3} parent=79 // pred_region
        %p1542 = scmp.lt.s32.totalorder %s25, 1
        %s1543 = scalar_select %p1542, %s25, 1
        %s1544 = smul.addr %s1543, 8
        %s1545 = scalar_lea.vmem %s13, %s1544
      $region84: #{forward.3} parent=79 // pred_fallthru
        _
    $region80: #{forward.3} parent=5 // pred_fallthru
      _
  $region6: #{forward.3} parent=0 // loop_footer
    %s23 = sadd.s32 1, %s19
  $region7: #{forward.3} parent=0 // loop_footer_branch
    %18 = sbr.rel target = $region3
  $region8: #{forward.3} parent=0 // loop_exit
    _

</llo_original>
